<compile_context>
chip_gen: v5e
topology: v5e:2x2
jax: 0.10.0
libtpu: 0.0.40
codegen_flags: <defaults>
</compile_context>

<pallas_src>
import math
import jax
import jax.numpy as jnp
from jax.experimental import pallas as pl
from jax.experimental.pallas import tpu as pltpu


def _mlp_kernel(x_ref, w1_ref, b1_ref, w2_ref, b2_ref, w3_ref, b3_ref, o_ref):
    # x_ref : [TM, D_in]      f32  (cast to bf16 in-kernel)
    # w1_ref: [D_in, H] bf16  b1_ref: [1, H]   f32
    # w2_ref: [H, H]    bf16  b2_ref: [1, H]   f32
    # w3_ref: [H, Np]   bf16  b3_ref: [1, Np]  f32   (Np = padded d_out)
    # o_ref : [TM, Np]  f32
    x = x_ref[...].astype(jnp.bfloat16)          # VPU cast, no extra HBM pass

    h1 = jnp.dot(x, w1_ref[...], preferred_element_type=jnp.float32)
    h1 = jnp.maximum(h1 + b1_ref[...], 0.0).astype(jnp.bfloat16)

    h2 = jnp.dot(h1, w2_ref[...], preferred_element_type=jnp.float32)
    h2 = jnp.maximum(h2 + b2_ref[...], 0.0).astype(jnp.bfloat16)

    out = jnp.dot(h2, w3_ref[...], preferred_element_type=jnp.float32)
    o_ref[...] = (out + b3_ref[...]).astype(o_ref.dtype)


def _round_up(v, m):
    return (v + m - 1) // m * m


def _pick_tm(batch):
    # Largest batch tile that still yields >= 2 grid steps so the "parallel"
    # axis can split across both v7x TensorCores; big tiles amortize weight
    # re-push + per-step overhead on MXU-bound v5e. Always a multiple of 16
    # (bf16 packs 16 rows per vreg tile).
    for tm in (512, 256, 128, 64, 32, 16):
        if pl.cdiv(batch, tm) >= 2:
            return tm
    return max(16, _round_up(batch, 16))  # tiny batch: single tile


def neural_network_forward(x_nchw, params):
    """Forward pass equivalent to the PyTorch NeuralNetwork module.

    x_nchw: [B, ...] float32 (flattened per-sample, nn.Flatten()).
    params: dict with w1,b1,w2,b2,w3,b3 (weights stored [in, out]).
    Returns [B, d_out] float32 logits.
    """
    B = x_nchw.shape[0]
    x2d = x_nchw.reshape(B, -1).astype(jnp.float32)   # nn.Flatten(); free reshape
    d_in = x2d.shape[1]

    w1, b1 = params["w1"], params["b1"]
    w2, b2 = params["w2"], params["b2"]
    w3, b3 = params["w3"], params["b3"]
    hidden = w1.shape[1]
    d_out = w3.shape[1]

    # ---- layout prep (plain JAX glue; only touches the tiny weights) ------
    w1_bf = w1.astype(jnp.bfloat16)
    w2_bf = w2.astype(jnp.bfloat16)

    # Pad output features to a full 128-lane tile (lane-dense, unmasked vst).
    n_pad = _round_up(d_out, 128)
    w3_bf = jnp.zeros((hidden, n_pad), jnp.bfloat16).at[:, :d_out].set(
        w3.astype(jnp.bfloat16))
    b3_p = jnp.zeros((1, n_pad), jnp.float32).at[:, :d_out].set(
        b3.astype(jnp.float32))
    b1_f = b1.astype(jnp.float32)
    b2_f = b2.astype(jnp.float32)

    # Batch tiling: no padding of x — ragged last tile is masked by Pallas.
    tm = _pick_tm(B)
    n_tiles = pl.cdiv(B, tm)

    # ---- pallas_call -------------------------------------------------------
    const = lambda shape: pl.BlockSpec(shape, lambda i: (0,) * len(shape))

    flops = 2 * B * (d_in * hidden + hidden * hidden + hidden * n_pad)
    bytes_accessed = (
        x2d.size * 4                                           # f32 x stream
        + w1_bf.size * 2 + w2_bf.size * 2 + w3_bf.size * 2     # bf16 weights
        + b1_f.size * 4 + b2_f.size * 4 + b3_p.size * 4        # f32 biases
        + B * n_pad * 4)                                       # f32 logits

    out = pl.pallas_call(
        _mlp_kernel,
        out_shape=jax.ShapeDtypeStruct((B, n_pad), jnp.float32),
        grid_spec=pltpu.PrefetchScalarGridSpec(
            num_scalar_prefetch=0,
            grid=(n_tiles,),
            in_specs=[
                pl.BlockSpec((tm, d_in), lambda i: (i, 0)),   # x tile moves
                const((d_in, hidden)), const((1, hidden)),    # weights stay
                const((hidden, hidden)), const((1, hidden)),  # VMEM-resident
                const((hidden, n_pad)), const((1, n_pad)),
            ],
            out_specs=pl.BlockSpec((tm, n_pad), lambda i: (i, 0)),
        ),
        compiler_params=pltpu.CompilerParams(
            dimension_semantics=("parallel",)),
        cost_estimate=pl.CostEstimate(
            flops=flops, transcendentals=0, bytes_accessed=bytes_accessed),
    )(x2d, w1_bf, b1_f, w2_bf, b2_f, w3_bf, b3_p)

    # Slice padded lanes back to the logical output width.
    return out[:, :d_out]


def init_params(key, num_inputs, num_outputs, hidden=512):
    """Deterministic init mimicking PyTorch nn.Linear defaults
    (uniform(-1/sqrt(fan_in), 1/sqrt(fan_in)) for weights and biases)."""
    ks = jax.random.split(key, 6)

    def linear(kw, kb, fan_in, fan_out):
        bound = 1.0 / math.sqrt(fan_in)
        w = jax.random.uniform(kw, (fan_in, fan_out), jnp.float32, -bound, bound)
        b = jax.random.uniform(kb, (1, fan_out), jnp.float32, -bound, bound)
        return w, b

    w1, b1 = linear(ks[0], ks[1], num_inputs, hidden)
    w2, b2 = linear(ks[2], ks[3], hidden, hidden)
    w3, b3 = linear(ks[4], ks[5], hidden, num_outputs)
    return {"w1": w1, "b1": b1, "w2": w2, "b2": b2, "w3": w3, "b3": b3}


def _reference(x_nchw, p):
    x = x_nchw.reshape(x_nchw.shape[0], -1)
    h1 = jnp.maximum(x @ p["w1"] + p["b1"], 0.0)
    h2 = jnp.maximum(h1 @ p["w2"] + p["b2"], 0.0)
    return h2 @ p["w3"] + p["b3"]


if __name__ == "__main__":
    key = jax.random.PRNGKey(0)
    k_x, k_p = jax.random.split(key)

    # Small NCHW input: batch=2, channels=4, spatial=16 -> numInputs = 1024.
    B, C, H, W = 2, 4, 16, 16
    num_inputs = C * H * W
    num_outputs = 10

    x = jax.random.normal(k_x, (B, C, H, W), dtype=jnp.float32)
    params = init_params(k_p, num_inputs, num_outputs)

    logits = neural_network_forward(x, params)
    jax.block_until_ready(logits)

    ref = _reference(x, params)
    assert logits.shape == (B, num_outputs)
    # bf16 weights/activations with f32 accumulation -> loosened tolerance
    # vs. the pure-f32 reference.
    assert jnp.allclose(logits, ref, atol=5e-2, rtol=5e-2), (
        float(jnp.max(jnp.abs(logits - ref))))

    print("KERNEL_OK")
</pallas_src>

<mosaic_0001>
module attributes {stable_mosaic.version = 11 : i64} {
  func.func @_mlp_kernel(%arg0: i32, %arg1: memref<16x1024xf32, #tpu.memory_space<vmem>>, %arg2: memref<1024x512xbf16, #tpu.memory_space<vmem>>, %arg3: memref<1x512xf32, #tpu.memory_space<vmem>>, %arg4: memref<512x512xbf16, #tpu.memory_space<vmem>>, %arg5: memref<1x512xf32, #tpu.memory_space<vmem>>, %arg6: memref<512x128xbf16, #tpu.memory_space<vmem>>, %arg7: memref<1x128xf32, #tpu.memory_space<vmem>>, %arg8: memref<16x128xf32, #tpu.memory_space<vmem>>) attributes {dimension_semantics = [#tpu.dimension_semantics<parallel>], iteration_bounds = array<i64: 1>, scalar_prefetch = 0 : i64, scratch_operands = 0 : i64, tpu.core_type = #tpu.core_type<tc>, window_params = [{transform_indices = @transform_0, window_bounds = array<i64: 16, 1024>}, {pipeline_mode = #tpu.pipeline_mode<synchronous>, transform_indices = @transform_1, window_bounds = array<i64: 1024, 512>}, {pipeline_mode = #tpu.pipeline_mode<synchronous>, transform_indices = @transform_2, window_bounds = array<i64: 1, 512>}, {pipeline_mode = #tpu.pipeline_mode<synchronous>, transform_indices = @transform_3, window_bounds = array<i64: 512, 512>}, {pipeline_mode = #tpu.pipeline_mode<synchronous>, transform_indices = @transform_4, window_bounds = array<i64: 1, 512>}, {pipeline_mode = #tpu.pipeline_mode<synchronous>, transform_indices = @transform_5, window_bounds = array<i64: 512, 128>}, {pipeline_mode = #tpu.pipeline_mode<synchronous>, transform_indices = @transform_6, window_bounds = array<i64: 1, 128>}, {transform_indices = @transform_7, window_bounds = array<i64: 16, 128>}]} {
    %c0 = arith.constant 0 : index
    %c0_0 = arith.constant 0 : index
    %0 = vector.load %arg1[%c0, %c0_0] : memref<16x1024xf32, #tpu.memory_space<vmem>>, vector<16x1024xf32>
    %1 = arith.truncf %0 : vector<16x1024xf32> to vector<16x1024xbf16>
    %c0_1 = arith.constant 0 : index
    %c0_2 = arith.constant 0 : index
    %2 = vector.load %arg2[%c0_1, %c0_2] : memref<1024x512xbf16, #tpu.memory_space<vmem>>, vector<1024x512xbf16>
    %cst = arith.constant dense<0.000000e+00> : vector<16x512xf32>
    %3 = tpu.matmul %1, %2, %cst {dimension_numbers = #tpu.dot_dimension_numbers<[1], [0], [0], [1], [0, 0, 1, 1], [], []>} : vector<16x1024xbf16>, vector<1024x512xbf16>, vector<16x512xf32> -> vector<16x512xf32>
    %c0_3 = arith.constant 0 : index
    %c0_4 = arith.constant 0 : index
    %4 = vector.load %arg3[%c0_3, %c0_4] : memref<1x512xf32, #tpu.memory_space<vmem>>, vector<1x512xf32>
    %5 = vector.broadcast %4 : vector<1x512xf32> to vector<16x512xf32>
    %6 = arith.addf %3, %5 : vector<16x512xf32>
    %cst_5 = arith.constant 0.000000e+00 : f32
    %7 = vector.broadcast %cst_5 : f32 to vector<16x512xf32>
    %8 = arith.maximumf %6, %7 : vector<16x512xf32>
    %9 = arith.truncf %8 : vector<16x512xf32> to vector<16x512xbf16>
    %c0_6 = arith.constant 0 : index
    %c0_7 = arith.constant 0 : index
    %10 = vector.load %arg4[%c0_6, %c0_7] : memref<512x512xbf16, #tpu.memory_space<vmem>>, vector<512x512xbf16>
    %cst_8 = arith.constant dense<0.000000e+00> : vector<16x512xf32>
    %11 = tpu.matmul %9, %10, %cst_8 {dimension_numbers = #tpu.dot_dimension_numbers<[1], [0], [0], [1], [0, 0, 1, 1], [], []>} : vector<16x512xbf16>, vector<512x512xbf16>, vector<16x512xf32> -> vector<16x512xf32>
    %c0_9 = arith.constant 0 : index
    %c0_10 = arith.constant 0 : index
    %12 = vector.load %arg5[%c0_9, %c0_10] : memref<1x512xf32, #tpu.memory_space<vmem>>, vector<1x512xf32>
    %13 = vector.broadcast %12 : vector<1x512xf32> to vector<16x512xf32>
    %14 = arith.addf %11, %13 : vector<16x512xf32>
    %cst_11 = arith.constant 0.000000e+00 : f32
    %15 = vector.broadcast %cst_11 : f32 to vector<16x512xf32>
    %16 = arith.maximumf %14, %15 : vector<16x512xf32>
    %17 = arith.truncf %16 : vector<16x512xf32> to vector<16x512xbf16>
    %c0_12 = arith.constant 0 : index
    %c0_13 = arith.constant 0 : index
    %18 = vector.load %arg6[%c0_12, %c0_13] : memref<512x128xbf16, #tpu.memory_space<vmem>>, vector<512x128xbf16>
    %cst_14 = arith.constant dense<0.000000e+00> : vector<16x128xf32>
    %19 = tpu.matmul %17, %18, %cst_14 {dimension_numbers = #tpu.dot_dimension_numbers<[1], [0], [0], [1], [0, 0, 1, 1], [], []>} : vector<16x512xbf16>, vector<512x128xbf16>, vector<16x128xf32> -> vector<16x128xf32>
    %c0_15 = arith.constant 0 : index
    %c0_16 = arith.constant 0 : index
    %20 = vector.load %arg7[%c0_15, %c0_16] : memref<1x128xf32, #tpu.memory_space<vmem>>, vector<1x128xf32>
    %21 = vector.broadcast %20 : vector<1x128xf32> to vector<16x128xf32>
    %22 = arith.addf %19, %21 : vector<16x128xf32>
    %c0_17 = arith.constant 0 : index
    %c0_18 = arith.constant 0 : index
    %23 = vector.load %arg8[%c0_17, %c0_18] : memref<16x128xf32, #tpu.memory_space<vmem>>, vector<16x128xf32>
    tpu.vector_store %arg8[%c0_17, %c0_18], %22 {strides = array<i32>} : memref<16x128xf32, #tpu.memory_space<vmem>>, vector<16x128xf32>,
    return
  }
  func.func @transform_0(%arg0: i32) -> (i32, i32) {
    %c0_i32 = arith.constant 0 : i32
    %c0_i32_0 = arith.constant 0 : i32
    return %arg0, %c0_i32 : i32, i32
  }
  func.func @transform_1(%arg0: i32) -> (i32, i32) {
    %c0_i32 = arith.constant 0 : i32
    %c0_i32_0 = arith.constant 0 : i32
    %c0_i32_1 = arith.constant 0 : i32
    return %c0_i32, %c0_i32_0 : i32, i32
  }
  func.func @transform_2(%arg0: i32) -> (i32, i32) {
    %c0_i32 = arith.constant 0 : i32
    %c0_i32_0 = arith.constant 0 : i32
    %c0_i32_1 = arith.constant 0 : i32
    return %c0_i32, %c0_i32_0 : i32, i32
  }
  func.func @transform_3(%arg0: i32) -> (i32, i32) {
    %c0_i32 = arith.constant 0 : i32
    %c0_i32_0 = arith.constant 0 : i32
    %c0_i32_1 = arith.constant 0 : i32
    return %c0_i32, %c0_i32_0 : i32, i32
  }
  func.func @transform_4(%arg0: i32) -> (i32, i32) {
    %c0_i32 = arith.constant 0 : i32
    %c0_i32_0 = arith.constant 0 : i32
    %c0_i32_1 = arith.constant 0 : i32
    return %c0_i32, %c0_i32_0 : i32, i32
  }
  func.func @transform_5(%arg0: i32) -> (i32, i32) {
    %c0_i32 = arith.constant 0 : i32
    %c0_i32_0 = arith.constant 0 : i32
    %c0_i32_1 = arith.constant 0 : i32
    return %c0_i32, %c0_i32_0 : i32, i32
  }
  func.func @transform_6(%arg0: i32) -> (i32, i32) {
    %c0_i32 = arith.constant 0 : i32
    %c0_i32_0 = arith.constant 0 : i32
    %c0_i32_1 = arith.constant 0 : i32
    return %c0_i32, %c0_i32_0 : i32, i32
  }
  func.func @transform_7(%arg0: i32) -> (i32, i32) {
    %c0_i32 = arith.constant 0 : i32
    %c0_i32_0 = arith.constant 0 : i32
    return %arg0, %c0_i32 : i32, i32
  }
}

</mosaic_0001>

<llo_original>
// kernel: tpu_custom_call.1
$region0: #{tpu_custom_call.1}
  #allocation0 [shape = 'u32[]', space=smem, size = 0x4, offset = 0x4, fixed_abs, tag = 'smem constant byte address 0x4 - core index']
  #allocation1 [shape = 'u32[72,128]{1,0:T(1,128)}', space=vmem, size = 0x9000, scoped, tag = 'internal scratch']
  %s0 = inlined_call_operand.hbm [shape: f32[2,1024], index: 0, kind: input, shape index: {}]
  %s1 = inlined_call_operand.hbm [shape: bf16[1024,512], index: 1, kind: input, shape index: {}]
  %s2 = inlined_call_operand.hbm [shape: f32[1,512], index: 2, kind: input, shape index: {}]
  %s3 = inlined_call_operand.hbm [shape: bf16[512,512], index: 3, kind: input, shape index: {}]
  %s4 = inlined_call_operand.hbm [shape: f32[1,512], index: 4, kind: input, shape index: {}]
  %s5 = inlined_call_operand.hbm [shape: bf16[512,128], index: 5, kind: input, shape index: {}]
  %s6 = inlined_call_operand.vmem [shape: f32[1,128], index: 6, kind: input, shape index: {}]
  %s7 = inlined_call_operand.hbm [shape: f32[2,128], index: 7, kind: output, shape index: {}]
  %s8 = sld [smem:[#allocation0]]
  $region62: #{tpu_custom_call.1} parent=0
    _
  %s10 = ssub.s32 1, %s8
  %s11 = scalar_select 0, %s10, %s8
  $region1: #{tpu_custom_call.1} parent=0
    #allocation2 [shape = 'u8[65536]{0}', space=vmem, size = 0x10000, scoped, tag = 'input window, operand 0, single buffered']
    #allocation3 [shape = 's32[1]{0}', space=sflag, size = 0x4, scoped, tag = 'scoped memory for tpu_custom_call.1']
    #allocation4 [shape = 's32[1]{0}', space=sflag, size = 0x4, scoped, tag = 'scoped memory for tpu_custom_call.1']
    #allocation5 [shape = 'u8[1048576]{0}', space=vmem, size = 0x100000, scoped, tag = 'input window, operand 1, single buffered']
    #allocation6 [shape = 's32[1]{0}', space=sflag, size = 0x4, scoped, tag = 'scoped memory for tpu_custom_call.1']
    #allocation7 [shape = 'u8[2048]{0}', space=vmem, size = 0x800, scoped, tag = 'input window, operand 2, single buffered']
    #allocation8 [shape = 'u8[524288]{0}', space=vmem, size = 0x80000, scoped, tag = 'input window, operand 3, single buffered']
    #allocation9 [shape = 's32[1]{0}', space=sflag, size = 0x4, scoped, tag = 'scoped memory for tpu_custom_call.1']
    #allocation10 [shape = 'u8[2048]{0}', space=vmem, size = 0x800, scoped, tag = 'input window, operand 4, single buffered']
    #allocation11 [shape = 'u8[131072]{0}', space=vmem, size = 0x20000, scoped, tag = 'input window, operand 5, single buffered']
    #allocation12 [shape = 's32[1]{0}', space=sflag, size = 0x4, scoped, tag = 'scoped memory for tpu_custom_call.1']
    #allocation13 [shape = 'u8[8192]{0}', space=vmem, size = 0x2000, scoped, tag = 'output window, operand 0, single buffered']
    %12 = vsyncpa [#allocation3], 0
    %13 = vsyncpa [#allocation6], 0
    %14 = vsyncpa [#allocation9], 0
    %15 = vsyncpa [#allocation12], 0
    %16 = vsyncpa [#allocation4], 0
    // Predicated region
    $region2: #{tpu_custom_call.1} parent=1 // pred_check
      _
    $region3: #{tpu_custom_call.1} parent=1 // pred_check_branch
      %18 = sbr.rel (0) target = $region5
    $region4: #{tpu_custom_call.1} parent=1 // pred_region
      %20 = vsyncadd [#allocation3], 1792
      %s21 = sshll.u32 %s0, 4
      %s22 = int_to_ptr.hbm [resolvable:$true] %s21
      %s23 = sshll.u32 [#allocation2], 4
      %s24 = int_to_ptr.vmem [resolvable:$true] %s23
      %29 = dma.hbm_to_vmem [thread:$0]  %s22, 256, %s24, [#allocation3], 256, 256, 16
    $region5: #{tpu_custom_call.1} parent=1 // pred_fallthru
      _
    // Predicated region
    $region6: #{tpu_custom_call.1} parent=1 // pred_check
      _
    $region7: #{tpu_custom_call.1} parent=1 // pred_check_branch
      %31 = sbr.rel (0) target = $region9
    $region8: #{tpu_custom_call.1} parent=1 // pred_region
      %33 = vsyncadd [#allocation6], 0
      %s34 = sshll.u32 %s1, 4
      %s35 = int_to_ptr.hbm [resolvable:$true] %s34
      %s36 = sshll.u32 [#allocation5], 4
      %s37 = int_to_ptr.vmem [resolvable:$true] %s36
      %42 = dma.hbm_to_vmem [thread:$0]  %s35, 32768, %s37, [#allocation6], 256, 256, 16
    $region9: #{tpu_custom_call.1} parent=1 // pred_fallthru
      _
    // Predicated region
    $region10: #{tpu_custom_call.1} parent=1 // pred_check
      _
    $region11: #{tpu_custom_call.1} parent=1 // pred_check_branch
      %44 = sbr.rel (0) target = $region13
    $region12: #{tpu_custom_call.1} parent=1 // pred_region
      %46 = vsyncadd [#allocation6], 0
      %s48 = sshll.u32 %s2, 4
      %s49 = int_to_ptr.hbm [resolvable:$true] %s48
      %s50 = sshll.u32 [#allocation7], 4
      %s51 = int_to_ptr.vmem [resolvable:$true] %s50
      %53 = dma.hbm_to_vmem [thread:$0]  %s49, 64, %s51, [#allocation6]
    $region13: #{tpu_custom_call.1} parent=1 // pred_fallthru
      _
    // Predicated region
    $region14: #{tpu_custom_call.1} parent=1 // pred_check
      _
    $region15: #{tpu_custom_call.1} parent=1 // pred_check_branch
      %55 = sbr.rel (0) target = $region17
    $region16: #{tpu_custom_call.1} parent=1 // pred_region
      %57 = vsyncadd [#allocation9], 0
      %s58 = sshll.u32 %s3, 4
      %s59 = int_to_ptr.hbm [resolvable:$true] %s58
      %s60 = sshll.u32 [#allocation8], 4
      %s61 = int_to_ptr.vmem [resolvable:$true] %s60
      %66 = dma.hbm_to_vmem [thread:$0]  %s59, 16384, %s61, [#allocation9], 256, 256, 16
    $region17: #{tpu_custom_call.1} parent=1 // pred_fallthru
      _
    // Predicated region
    $region18: #{tpu_custom_call.1} parent=1 // pred_check
      _
    $region19: #{tpu_custom_call.1} parent=1 // pred_check_branch
      %68 = sbr.rel (0) target = $region21
    $region20: #{tpu_custom_call.1} parent=1 // pred_region
      %70 = vsyncadd [#allocation9], 0
      %s72 = sshll.u32 %s4, 4
      %s73 = int_to_ptr.hbm [resolvable:$true] %s72
      %s74 = sshll.u32 [#allocation10], 4
      %s75 = int_to_ptr.vmem [resolvable:$true] %s74
      %77 = dma.hbm_to_vmem [thread:$0]  %s73, 64, %s75, [#allocation9]
    $region21: #{tpu_custom_call.1} parent=1 // pred_fallthru
      _
    // Predicated region
    $region22: #{tpu_custom_call.1} parent=1 // pred_check
      _
    $region23: #{tpu_custom_call.1} parent=1 // pred_check_branch
      %79 = sbr.rel (0) target = $region25
    $region24: #{tpu_custom_call.1} parent=1 // pred_region
      %81 = vsyncadd [#allocation12], 0
      %s82 = sshll.u32 %s5, 4
      %s83 = int_to_ptr.hbm [resolvable:$true] %s82
      %s84 = sshll.u32 [#allocation11], 4
      %s85 = int_to_ptr.vmem [resolvable:$true] %s84
      %90 = dma.hbm_to_vmem [thread:$0]  %s83, 4096, %s85, [#allocation12], 64, 64, 4
    $region25: #{tpu_custom_call.1} parent=1 // pred_fallthru
      _
    // Predicated region
    $region26: #{tpu_custom_call.1} parent=1 // pred_check
      _
    $region27: #{tpu_custom_call.1} parent=1 // pred_check_branch
      %92 = sbr.rel (0) target = $region29
    $region28: #{tpu_custom_call.1} parent=1 // pred_region
      _
    $region29: #{tpu_custom_call.1} parent=1 // pred_fallthru
      _
    // Predicated region
    $region30: #{tpu_custom_call.1} parent=1 // pred_check
      _
    $region31: #{tpu_custom_call.1} parent=1 // pred_check_branch
      %94 = sbr.rel (0) target = $region33
    $region32: #{tpu_custom_call.1} parent=1 // pred_region
      %96 = dma.done [#allocation3], 2048
    $region33: #{tpu_custom_call.1} parent=1 // pred_fallthru
      _
    // Predicated region
    $region34: #{tpu_custom_call.1} parent=1 // pred_check
      _
    $region35: #{tpu_custom_call.1} parent=1 // pred_check_branch
      %98 = sbr.rel (0) target = $region37
    $region36: #{tpu_custom_call.1} parent=1 // pred_region
      %100 = dma.done [#allocation6], 32768
    $region37: #{tpu_custom_call.1} parent=1 // pred_fallthru
      _
    // Predicated region
    $region38: #{tpu_custom_call.1} parent=1 // pred_check
      _
    $region39: #{tpu_custom_call.1} parent=1 // pred_check_branch
      %102 = sbr.rel (0) target = $region41
    $region40: #{tpu_custom_call.1} parent=1 // pred_region
      %104 = dma.done [#allocation6], 64
    $region41: #{tpu_custom_call.1} parent=1 // pred_fallthru
      _
    // Predicated region
    $region42: #{tpu_custom_call.1} parent=1 // pred_check
      _
    $region43: #{tpu_custom_call.1} parent=1 // pred_check_branch
      %106 = sbr.rel (0) target = $region45
    $region44: #{tpu_custom_call.1} parent=1 // pred_region
      %108 = dma.done [#allocation9], 16384
    $region45: #{tpu_custom_call.1} parent=1 // pred_fallthru
      _
    // Predicated region
    $region46: #{tpu_custom_call.1} parent=1 // pred_check
      _
    $region47: #{tpu_custom_call.1} parent=1 // pred_check_branch
      %110 = sbr.rel (0) target = $region49
    $region48: #{tpu_custom_call.1} parent=1 // pred_region
      %112 = dma.done [#allocation9], 64
    $region49: #{tpu_custom_call.1} parent=1 // pred_fallthru
      _
    // Predicated region
    $region50: #{tpu_custom_call.1} parent=1 // pred_check
      _
    $region51: #{tpu_custom_call.1} parent=1 // pred_check_branch
      %114 = sbr.rel (0) target = $region53
    $region52: #{tpu_custom_call.1} parent=1 // pred_region
      %116 = dma.done [#allocation12], 4096
    $region53: #{tpu_custom_call.1} parent=1 // pred_fallthru
      _
    %v117 = vld [vmem:[#allocation2] sm:$0xff]
    %v118 = vld [vmem:[#allocation2 + $0x8] sm:$0xff]
    %v119 = vld [vmem:[#allocation2 + $0x10] sm:$0xff]
    %v120 = vld [vmem:[#allocation2 + $0x18] sm:$0xff]
    %v121 = vld [vmem:[#allocation2 + $0x20] sm:$0xff]
    %v122 = vld [vmem:[#allocation2 + $0x28] sm:$0xff]
    %v123 = vld [vmem:[#allocation2 + $0x30] sm:$0xff]
    %v124 = vld [vmem:[#allocation2 + $0x38] sm:$0xff]
    %v125 = vld [vmem:[#allocation2 + $0x40] sm:$0xff]
    %v126 = vld [vmem:[#allocation2 + $0x48] sm:$0xff]
    %v127 = vld [vmem:[#allocation2 + $0x50] sm:$0xff]
    %v128 = vld [vmem:[#allocation2 + $0x58] sm:$0xff]
    %v129 = vld [vmem:[#allocation2 + $0x60] sm:$0xff]
    %v130 = vld [vmem:[#allocation2 + $0x68] sm:$0xff]
    %v131 = vld [vmem:[#allocation2 + $0x70] sm:$0xff]
    %v132 = vld [vmem:[#allocation2 + $0x78] sm:$0xff]
    %149 = vst [vmem:[#allocation1] ss:$4 sm:$0xff] %v117
    %s150 = scalar_lea.vmem [#allocation1], 1
    %151 = vst [vmem:[%s150] ss:$4 sm:$0xff] %v119
    %s152 = scalar_lea.vmem [#allocation1], 2
    %153 = vst [vmem:[%s152] ss:$4 sm:$0xff] %v121
    %s154 = scalar_lea.vmem [#allocation1], 3
    %155 = vst [vmem:[%s154] ss:$4 sm:$0xff] %v123
    %s156 = scalar_lea.vmem [#allocation1], 32
    %157 = vst [vmem:[%s156] ss:$4 sm:$0xff] %v118
    %s158 = scalar_lea.vmem [#allocation1], 33
    %159 = vst [vmem:[%s158] ss:$4 sm:$0xff] %v120
    %s160 = scalar_lea.vmem [#allocation1], 34
    %161 = vst [vmem:[%s160] ss:$4 sm:$0xff] %v122
    %s162 = scalar_lea.vmem [#allocation1], 35
    %163 = vst [vmem:[%s162] ss:$4 sm:$0xff] %v124
    %v164 = vld.sshfl [vmem:[#allocation1] sm:$0xff pattern:$0x73625140]
    %v165 = vld.sshfl [vmem:[#allocation1 + $0x8] sm:$0xff pattern:$0x73625140]
    %v166 = vld.sshfl [vmem:[#allocation1 + $0x10] sm:$0xff pattern:$0x73625140]
    %v167 = vld.sshfl [vmem:[#allocation1 + $0x18] sm:$0xff pattern:$0x73625140]
    %v168 = vld.sshfl [vmem:[#allocation1 + $0x20] sm:$0xff pattern:$0x73625140]
    %v169 = vld.sshfl [vmem:[#allocation1 + $0x28] sm:$0xff pattern:$0x73625140]
    %v170 = vld.sshfl [vmem:[#allocation1 + $0x30] sm:$0xff pattern:$0x73625140]
    %v171 = vld.sshfl [vmem:[#allocation1 + $0x38] sm:$0xff pattern:$0x73625140]
    %172 = vst [vmem:[#allocation1] ss:$4 sm:$0xff] %v125
    %173 = vst [vmem:[%s150] ss:$4 sm:$0xff] %v127
    %174 = vst [vmem:[%s152] ss:$4 sm:$0xff] %v129
    %175 = vst [vmem:[%s154] ss:$4 sm:$0xff] %v131
    %176 = vst [vmem:[%s156] ss:$4 sm:$0xff] %v126
    %177 = vst [vmem:[%s158] ss:$4 sm:$0xff] %v128
    %178 = vst [vmem:[%s160] ss:$4 sm:$0xff] %v130
    %179 = vst [vmem:[%s162] ss:$4 sm:$0xff] %v132
    %v180 = vld.sshfl [vmem:[#allocation1] sm:$0xff pattern:$0x73625140]
    %v181 = vld.sshfl [vmem:[#allocation1 + $0x8] sm:$0xff pattern:$0x73625140]
    %v182 = vld.sshfl [vmem:[#allocation1 + $0x10] sm:$0xff pattern:$0x73625140]
    %v183 = vld.sshfl [vmem:[#allocation1 + $0x18] sm:$0xff pattern:$0x73625140]
    %v184 = vld.sshfl [vmem:[#allocation1 + $0x20] sm:$0xff pattern:$0x73625140]
    %v185 = vld.sshfl [vmem:[#allocation1 + $0x28] sm:$0xff pattern:$0x73625140]
    %v186 = vld.sshfl [vmem:[#allocation1 + $0x30] sm:$0xff pattern:$0x73625140]
    %v187 = vld.sshfl [vmem:[#allocation1 + $0x38] sm:$0xff pattern:$0x73625140]
    %v204 = vpack.c.bf16 %v180, %v164
    %v205 = vpack.c.bf16 %v181, %v165
    %v206 = vpack.c.bf16 %v182, %v166
    %v207 = vpack.c.bf16 %v183, %v167
    %v208 = vpack.c.bf16 %v184, %v168
    %v209 = vpack.c.bf16 %v185, %v169
    %v210 = vpack.c.bf16 %v186, %v170
    %v211 = vpack.c.bf16 %v187, %v171
    %v212 = vld [vmem:[#allocation5] sm:$0xff]
    %v213 = vld [vmem:[#allocation5 + $0x8] sm:$0xff]
    %v214 = vld [vmem:[#allocation5 + $0x10] sm:$0xff]
    %v215 = vld [vmem:[#allocation5 + $0x18] sm:$0xff]
    %v216 = vld [vmem:[#allocation5 + $0x20] sm:$0xff]
    %v217 = vld [vmem:[#allocation5 + $0x28] sm:$0xff]
    %v218 = vld [vmem:[#allocation5 + $0x30] sm:$0xff]
    %v219 = vld [vmem:[#allocation5 + $0x38] sm:$0xff]
    %v220 = vld [vmem:[#allocation5 + $0x40] sm:$0xff]
    %v221 = vld [vmem:[#allocation5 + $0x48] sm:$0xff]
    %v222 = vld [vmem:[#allocation5 + $0x50] sm:$0xff]
    %v223 = vld [vmem:[#allocation5 + $0x58] sm:$0xff]
    %v224 = vld [vmem:[#allocation5 + $0x60] sm:$0xff]
    %v225 = vld [vmem:[#allocation5 + $0x68] sm:$0xff]
    %v226 = vld [vmem:[#allocation5 + $0x70] sm:$0xff]
    %v227 = vld [vmem:[#allocation5 + $0x78] sm:$0xff]
    %v228 = vld [vmem:[#allocation5 + $0x80] sm:$0xff]
    %v229 = vld [vmem:[#allocation5 + $0x88] sm:$0xff]
    %v230 = vld [vmem:[#allocation5 + $0x90] sm:$0xff]
    %v231 = vld [vmem:[#allocation5 + $0x98] sm:$0xff]
    %v232 = vld [vmem:[#allocation5 + $0xa0] sm:$0xff]
    %v233 = vld [vmem:[#allocation5 + $0xa8] sm:$0xff]
    %v234 = vld [vmem:[#allocation5 + $0xb0] sm:$0xff]
    %v235 = vld [vmem:[#allocation5 + $0xb8] sm:$0xff]
    %v236 = vld [vmem:[#allocation5 + $0xc0] sm:$0xff]
    %v237 = vld [vmem:[#allocation5 + $0xc8] sm:$0xff]
    %v238 = vld [vmem:[#allocation5 + $0xd0] sm:$0xff]
    %v239 = vld [vmem:[#allocation5 + $0xd8] sm:$0xff]
    %v240 = vld [vmem:[#allocation5 + $0xe0] sm:$0xff]
    %v241 = vld [vmem:[#allocation5 + $0xe8] sm:$0xff]
    %v242 = vld [vmem:[#allocation5 + $0xf0] sm:$0xff]
    %v243 = vld [vmem:[#allocation5 + $0xf8] sm:$0xff]
    %v244 = vld [vmem:[#allocation5 + $0x100] sm:$0xff]
    %v245 = vld [vmem:[#allocation5 + $0x108] sm:$0xff]
    %v246 = vld [vmem:[#allocation5 + $0x110] sm:$0xff]
    %v247 = vld [vmem:[#allocation5 + $0x118] sm:$0xff]
    %v248 = vld [vmem:[#allocation5 + $0x120] sm:$0xff]
    %v249 = vld [vmem:[#allocation5 + $0x128] sm:$0xff]
    %v250 = vld [vmem:[#allocation5 + $0x130] sm:$0xff]
    %v251 = vld [vmem:[#allocation5 + $0x138] sm:$0xff]
    %v252 = vld [vmem:[#allocation5 + $0x140] sm:$0xff]
    %v253 = vld [vmem:[#allocation5 + $0x148] sm:$0xff]
    %v254 = vld [vmem:[#allocation5 + $0x150] sm:$0xff]
    %v255 = vld [vmem:[#allocation5 + $0x158] sm:$0xff]
    %v256 = vld [vmem:[#allocation5 + $0x160] sm:$0xff]
    %v257 = vld [vmem:[#allocation5 + $0x168] sm:$0xff]
    %v258 = vld [vmem:[#allocation5 + $0x170] sm:$0xff]
    %v259 = vld [vmem:[#allocation5 + $0x178] sm:$0xff]
    %v260 = vld [vmem:[#allocation5 + $0x180] sm:$0xff]
    %v261 = vld [vmem:[#allocation5 + $0x188] sm:$0xff]
    %v262 = vld [vmem:[#allocation5 + $0x190] sm:$0xff]
    %v263 = vld [vmem:[#allocation5 + $0x198] sm:$0xff]
    %v264 = vld [vmem:[#allocation5 + $0x1a0] sm:$0xff]
    %v265 = vld [vmem:[#allocation5 + $0x1a8] sm:$0xff]
    %v266 = vld [vmem:[#allocation5 + $0x1b0] sm:$0xff]
    %v267 = vld [vmem:[#allocation5 + $0x1b8] sm:$0xff]
    %v268 = vld [vmem:[#allocation5 + $0x1c0] sm:$0xff]
    %v269 = vld [vmem:[#allocation5 + $0x1c8] sm:$0xff]
    %v270 = vld [vmem:[#allocation5 + $0x1d0] sm:$0xff]
    %v271 = vld [vmem:[#allocation5 + $0x1d8] sm:$0xff]
    %v272 = vld [vmem:[#allocation5 + $0x1e0] sm:$0xff]
    %v273 = vld [vmem:[#allocation5 + $0x1e8] sm:$0xff]
    %v274 = vld [vmem:[#allocation5 + $0x1f0] sm:$0xff]
    %v275 = vld [vmem:[#allocation5 + $0x1f8] sm:$0xff]
    %v276 = vld [vmem:[#allocation5 + $0x200] sm:$0xff]
    %v277 = vld [vmem:[#allocation5 + $0x208] sm:$0xff]
    %v278 = vld [vmem:[#allocation5 + $0x210] sm:$0xff]
    %v279 = vld [vmem:[#allocation5 + $0x218] sm:$0xff]
    %v280 = vld [vmem:[#allocation5 + $0x220] sm:$0xff]
    %v281 = vld [vmem:[#allocation5 + $0x228] sm:$0xff]
    %v282 = vld [vmem:[#allocation5 + $0x230] sm:$0xff]
    %v283 = vld [vmem:[#allocation5 + $0x238] sm:$0xff]
    %v284 = vld [vmem:[#allocation5 + $0x240] sm:$0xff]
    %v285 = vld [vmem:[#allocation5 + $0x248] sm:$0xff]
    %v286 = vld [vmem:[#allocation5 + $0x250] sm:$0xff]
    %v287 = vld [vmem:[#allocation5 + $0x258] sm:$0xff]
    %v288 = vld [vmem:[#allocation5 + $0x260] sm:$0xff]
    %v289 = vld [vmem:[#allocation5 + $0x268] sm:$0xff]
    %v290 = vld [vmem:[#allocation5 + $0x270] sm:$0xff]
    %v291 = vld [vmem:[#allocation5 + $0x278] sm:$0xff]
    %v292 = vld [vmem:[#allocation5 + $0x280] sm:$0xff]
    %v293 = vld [vmem:[#allocation5 + $0x288] sm:$0xff]
    %v294 = vld [vmem:[#allocation5 + $0x290] sm:$0xff]
    %v295 = vld [vmem:[#allocation5 + $0x298] sm:$0xff]
    %v296 = vld [vmem:[#allocation5 + $0x2a0] sm:$0xff]
    %v297 = vld [vmem:[#allocation5 + $0x2a8] sm:$0xff]
    %v298 = vld [vmem:[#allocation5 + $0x2b0] sm:$0xff]
    %v299 = vld [vmem:[#allocation5 + $0x2b8] sm:$0xff]
    %v300 = vld [vmem:[#allocation5 + $0x2c0] sm:$0xff]
    %v301 = vld [vmem:[#allocation5 + $0x2c8] sm:$0xff]
    %v302 = vld [vmem:[#allocation5 + $0x2d0] sm:$0xff]
    %v303 = vld [vmem:[#allocation5 + $0x2d8] sm:$0xff]
    %v304 = vld [vmem:[#allocation5 + $0x2e0] sm:$0xff]
    %v305 = vld [vmem:[#allocation5 + $0x2e8] sm:$0xff]
    %v306 = vld [vmem:[#allocation5 + $0x2f0] sm:$0xff]
    %v307 = vld [vmem:[#allocation5 + $0x2f8] sm:$0xff]
    %v308 = vld [vmem:[#allocation5 + $0x300] sm:$0xff]
    %v309 = vld [vmem:[#allocation5 + $0x308] sm:$0xff]
    %v310 = vld [vmem:[#allocation5 + $0x310] sm:$0xff]
    %v311 = vld [vmem:[#allocation5 + $0x318] sm:$0xff]
    %v312 = vld [vmem:[#allocation5 + $0x320] sm:$0xff]
    %v313 = vld [vmem:[#allocation5 + $0x328] sm:$0xff]
    %v314 = vld [vmem:[#allocation5 + $0x330] sm:$0xff]
    %v315 = vld [vmem:[#allocation5 + $0x338] sm:$0xff]
    %v316 = vld [vmem:[#allocation5 + $0x340] sm:$0xff]
    %v317 = vld [vmem:[#allocation5 + $0x348] sm:$0xff]
    %v318 = vld [vmem:[#allocation5 + $0x350] sm:$0xff]
    %v319 = vld [vmem:[#allocation5 + $0x358] sm:$0xff]
    %v320 = vld [vmem:[#allocation5 + $0x360] sm:$0xff]
    %v321 = vld [vmem:[#allocation5 + $0x368] sm:$0xff]
    %v322 = vld [vmem:[#allocation5 + $0x370] sm:$0xff]
    %v323 = vld [vmem:[#allocation5 + $0x378] sm:$0xff]
    %v324 = vld [vmem:[#allocation5 + $0x380] sm:$0xff]
    %v325 = vld [vmem:[#allocation5 + $0x388] sm:$0xff]
    %v326 = vld [vmem:[#allocation5 + $0x390] sm:$0xff]
    %v327 = vld [vmem:[#allocation5 + $0x398] sm:$0xff]
    %v328 = vld [vmem:[#allocation5 + $0x3a0] sm:$0xff]
    %v329 = vld [vmem:[#allocation5 + $0x3a8] sm:$0xff]
    %v330 = vld [vmem:[#allocation5 + $0x3b0] sm:$0xff]
    %v331 = vld [vmem:[#allocation5 + $0x3b8] sm:$0xff]
    %v332 = vld [vmem:[#allocation5 + $0x3c0] sm:$0xff]
    %v333 = vld [vmem:[#allocation5 + $0x3c8] sm:$0xff]
    %v334 = vld [vmem:[#allocation5 + $0x3d0] sm:$0xff]
    %v335 = vld [vmem:[#allocation5 + $0x3d8] sm:$0xff]
    %v336 = vld [vmem:[#allocation5 + $0x3e0] sm:$0xff]
    %v337 = vld [vmem:[#allocation5 + $0x3e8] sm:$0xff]
    %v338 = vld [vmem:[#allocation5 + $0x3f0] sm:$0xff]
    %v339 = vld [vmem:[#allocation5 + $0x3f8] sm:$0xff]
    %v340 = vld [vmem:[#allocation5 + $0x400] sm:$0xff]
    %v341 = vld [vmem:[#allocation5 + $0x408] sm:$0xff]
    %v342 = vld [vmem:[#allocation5 + $0x410] sm:$0xff]
    %v343 = vld [vmem:[#allocation5 + $0x418] sm:$0xff]
    %v344 = vld [vmem:[#allocation5 + $0x420] sm:$0xff]
    %v345 = vld [vmem:[#allocation5 + $0x428] sm:$0xff]
    %v346 = vld [vmem:[#allocation5 + $0x430] sm:$0xff]
    %v347 = vld [vmem:[#allocation5 + $0x438] sm:$0xff]
    %v348 = vld [vmem:[#allocation5 + $0x440] sm:$0xff]
    %v349 = vld [vmem:[#allocation5 + $0x448] sm:$0xff]
    %v350 = vld [vmem:[#allocation5 + $0x450] sm:$0xff]
    %v351 = vld [vmem:[#allocation5 + $0x458] sm:$0xff]
    %v352 = vld [vmem:[#allocation5 + $0x460] sm:$0xff]
    %v353 = vld [vmem:[#allocation5 + $0x468] sm:$0xff]
    %v354 = vld [vmem:[#allocation5 + $0x470] sm:$0xff]
    %v355 = vld [vmem:[#allocation5 + $0x478] sm:$0xff]
    %v356 = vld [vmem:[#allocation5 + $0x480] sm:$0xff]
    %v357 = vld [vmem:[#allocation5 + $0x488] sm:$0xff]
    %v358 = vld [vmem:[#allocation5 + $0x490] sm:$0xff]
    %v359 = vld [vmem:[#allocation5 + $0x498] sm:$0xff]
    %v360 = vld [vmem:[#allocation5 + $0x4a0] sm:$0xff]
    %v361 = vld [vmem:[#allocation5 + $0x4a8] sm:$0xff]
    %v362 = vld [vmem:[#allocation5 + $0x4b0] sm:$0xff]
    %v363 = vld [vmem:[#allocation5 + $0x4b8] sm:$0xff]
    %v364 = vld [vmem:[#allocation5 + $0x4c0] sm:$0xff]
    %v365 = vld [vmem:[#allocation5 + $0x4c8] sm:$0xff]
    %v366 = vld [vmem:[#allocation5 + $0x4d0] sm:$0xff]
    %v367 = vld [vmem:[#allocation5 + $0x4d8] sm:$0xff]
    %v368 = vld [vmem:[#allocation5 + $0x4e0] sm:$0xff]
    %v369 = vld [vmem:[#allocation5 + $0x4e8] sm:$0xff]
    %v370 = vld [vmem:[#allocation5 + $0x4f0] sm:$0xff]
    %v371 = vld [vmem:[#allocation5 + $0x4f8] sm:$0xff]
    %v372 = vld [vmem:[#allocation5 + $0x500] sm:$0xff]
    %v373 = vld [vmem:[#allocation5 + $0x508] sm:$0xff]
    %v374 = vld [vmem:[#allocation5 + $0x510] sm:$0xff]
    %v375 = vld [vmem:[#allocation5 + $0x518] sm:$0xff]
    %v376 = vld [vmem:[#allocation5 + $0x520] sm:$0xff]
    %v377 = vld [vmem:[#allocation5 + $0x528] sm:$0xff]
    %v378 = vld [vmem:[#allocation5 + $0x530] sm:$0xff]
    %v379 = vld [vmem:[#allocation5 + $0x538] sm:$0xff]
    %v380 = vld [vmem:[#allocation5 + $0x540] sm:$0xff]
    %v381 = vld [vmem:[#allocation5 + $0x548] sm:$0xff]
    %v382 = vld [vmem:[#allocation5 + $0x550] sm:$0xff]
    %v383 = vld [vmem:[#allocation5 + $0x558] sm:$0xff]
    %v384 = vld [vmem:[#allocation5 + $0x560] sm:$0xff]
    %v385 = vld [vmem:[#allocation5 + $0x568] sm:$0xff]
    %v386 = vld [vmem:[#allocation5 + $0x570] sm:$0xff]
    %v387 = vld [vmem:[#allocation5 + $0x578] sm:$0xff]
    %v388 = vld [vmem:[#allocation5 + $0x580] sm:$0xff]
    %v389 = vld [vmem:[#allocation5 + $0x588] sm:$0xff]
    %v390 = vld [vmem:[#allocation5 + $0x590] sm:$0xff]
    %v391 = vld [vmem:[#allocation5 + $0x598] sm:$0xff]
    %v392 = vld [vmem:[#allocation5 + $0x5a0] sm:$0xff]
    %v393 = vld [vmem:[#allocation5 + $0x5a8] sm:$0xff]
    %v394 = vld [vmem:[#allocation5 + $0x5b0] sm:$0xff]
    %v395 = vld [vmem:[#allocation5 + $0x5b8] sm:$0xff]
    %v396 = vld [vmem:[#allocation5 + $0x5c0] sm:$0xff]
    %v397 = vld [vmem:[#allocation5 + $0x5c8] sm:$0xff]
    %v398 = vld [vmem:[#allocation5 + $0x5d0] sm:$0xff]
    %v399 = vld [vmem:[#allocation5 + $0x5d8] sm:$0xff]
    %v400 = vld [vmem:[#allocation5 + $0x5e0] sm:$0xff]
    %v401 = vld [vmem:[#allocation5 + $0x5e8] sm:$0xff]
    %v402 = vld [vmem:[#allocation5 + $0x5f0] sm:$0xff]
    %v403 = vld [vmem:[#allocation5 + $0x5f8] sm:$0xff]
    %v404 = vld [vmem:[#allocation5 + $0x600] sm:$0xff]
    %v405 = vld [vmem:[#allocation5 + $0x608] sm:$0xff]
    %v406 = vld [vmem:[#allocation5 + $0x610] sm:$0xff]
    %v407 = vld [vmem:[#allocation5 + $0x618] sm:$0xff]
    %v408 = vld [vmem:[#allocation5 + $0x620] sm:$0xff]
    %v409 = vld [vmem:[#allocation5 + $0x628] sm:$0xff]
    %v410 = vld [vmem:[#allocation5 + $0x630] sm:$0xff]
    %v411 = vld [vmem:[#allocation5 + $0x638] sm:$0xff]
    %v412 = vld [vmem:[#allocation5 + $0x640] sm:$0xff]
    %v413 = vld [vmem:[#allocation5 + $0x648] sm:$0xff]
    %v414 = vld [vmem:[#allocation5 + $0x650] sm:$0xff]
    %v415 = vld [vmem:[#allocation5 + $0x658] sm:$0xff]
    %v416 = vld [vmem:[#allocation5 + $0x660] sm:$0xff]
    %v417 = vld [vmem:[#allocation5 + $0x668] sm:$0xff]
    %v418 = vld [vmem:[#allocation5 + $0x670] sm:$0xff]
    %v419 = vld [vmem:[#allocation5 + $0x678] sm:$0xff]
    %v420 = vld [vmem:[#allocation5 + $0x680] sm:$0xff]
    %v421 = vld [vmem:[#allocation5 + $0x688] sm:$0xff]
    %v422 = vld [vmem:[#allocation5 + $0x690] sm:$0xff]
    %v423 = vld [vmem:[#allocation5 + $0x698] sm:$0xff]
    %v424 = vld [vmem:[#allocation5 + $0x6a0] sm:$0xff]
    %v425 = vld [vmem:[#allocation5 + $0x6a8] sm:$0xff]
    %v426 = vld [vmem:[#allocation5 + $0x6b0] sm:$0xff]
    %v427 = vld [vmem:[#allocation5 + $0x6b8] sm:$0xff]
    %v428 = vld [vmem:[#allocation5 + $0x6c0] sm:$0xff]
    %v429 = vld [vmem:[#allocation5 + $0x6c8] sm:$0xff]
    %v430 = vld [vmem:[#allocation5 + $0x6d0] sm:$0xff]
    %v431 = vld [vmem:[#allocation5 + $0x6d8] sm:$0xff]
    %v432 = vld [vmem:[#allocation5 + $0x6e0] sm:$0xff]
    %v433 = vld [vmem:[#allocation5 + $0x6e8] sm:$0xff]
    %v434 = vld [vmem:[#allocation5 + $0x6f0] sm:$0xff]
    %v435 = vld [vmem:[#allocation5 + $0x6f8] sm:$0xff]
    %v436 = vld [vmem:[#allocation5 + $0x700] sm:$0xff]
    %v437 = vld [vmem:[#allocation5 + $0x708] sm:$0xff]
    %v438 = vld [vmem:[#allocation5 + $0x710] sm:$0xff]
    %v439 = vld [vmem:[#allocation5 + $0x718] sm:$0xff]
    %v440 = vld [vmem:[#allocation5 + $0x720] sm:$0xff]
    %v441 = vld [vmem:[#allocation5 + $0x728] sm:$0xff]
    %v442 = vld [vmem:[#allocation5 + $0x730] sm:$0xff]
    %v443 = vld [vmem:[#allocation5 + $0x738] sm:$0xff]
    %v444 = vld [vmem:[#allocation5 + $0x740] sm:$0xff]
    %v445 = vld [vmem:[#allocation5 + $0x748] sm:$0xff]
    %v446 = vld [vmem:[#allocation5 + $0x750] sm:$0xff]
    %v447 = vld [vmem:[#allocation5 + $0x758] sm:$0xff]
    %v448 = vld [vmem:[#allocation5 + $0x760] sm:$0xff]
    %v449 = vld [vmem:[#allocation5 + $0x768] sm:$0xff]
    %v450 = vld [vmem:[#allocation5 + $0x770] sm:$0xff]
    %v451 = vld [vmem:[#allocation5 + $0x778] sm:$0xff]
    %v452 = vld [vmem:[#allocation5 + $0x780] sm:$0xff]
    %v453 = vld [vmem:[#allocation5 + $0x788] sm:$0xff]
    %v454 = vld [vmem:[#allocation5 + $0x790] sm:$0xff]
    %v455 = vld [vmem:[#allocation5 + $0x798] sm:$0xff]
    %v456 = vld [vmem:[#allocation5 + $0x7a0] sm:$0xff]
    %v457 = vld [vmem:[#allocation5 + $0x7a8] sm:$0xff]
    %v458 = vld [vmem:[#allocation5 + $0x7b0] sm:$0xff]
    %v459 = vld [vmem:[#allocation5 + $0x7b8] sm:$0xff]
    %v460 = vld [vmem:[#allocation5 + $0x7c0] sm:$0xff]
    %v461 = vld [vmem:[#allocation5 + $0x7c8] sm:$0xff]
    %v462 = vld [vmem:[#allocation5 + $0x7d0] sm:$0xff]
    %v463 = vld [vmem:[#allocation5 + $0x7d8] sm:$0xff]
    %v464 = vld [vmem:[#allocation5 + $0x7e0] sm:$0xff]
    %v465 = vld [vmem:[#allocation5 + $0x7e8] sm:$0xff]
    %v466 = vld [vmem:[#allocation5 + $0x7f0] sm:$0xff]
    %v467 = vld [vmem:[#allocation5 + $0x7f8] sm:$0xff]
    %v468 = vld [vmem:[#allocation7] sm:$0xf]
    %v470 = vperm.slane %v468, 0
    %v471 = vperm.slane %v468, 1
    %v472 = vperm.slane %v468, 2
    %v473 = vperm.slane %v468, 3
    %v734 = vunpack.c.l.b16 %v212
    %v735 = vunpack.c.h.b16 %v212
    %v736 = vunpack.c.l.b16 %v213
    %v737 = vunpack.c.h.b16 %v213
    %v738 = vunpack.c.l.b16 %v214
    %v739 = vunpack.c.h.b16 %v214
    %v740 = vunpack.c.l.b16 %v215
    %v741 = vunpack.c.h.b16 %v215
    %v742 = vunpack.c.l.b16 %v216
    %v743 = vunpack.c.h.b16 %v216
    %v744 = vunpack.c.l.b16 %v217
    %v745 = vunpack.c.h.b16 %v217
    %v746 = vunpack.c.l.b16 %v218
    %v747 = vunpack.c.h.b16 %v218
    %v748 = vunpack.c.l.b16 %v219
    %v749 = vunpack.c.h.b16 %v219
    %v750 = vunpack.c.l.b16 %v220
    %v751 = vunpack.c.h.b16 %v220
    %v752 = vunpack.c.l.b16 %v221
    %v753 = vunpack.c.h.b16 %v221
    %v754 = vunpack.c.l.b16 %v222
    %v755 = vunpack.c.h.b16 %v222
    %v756 = vunpack.c.l.b16 %v223
    %v757 = vunpack.c.h.b16 %v223
    %v758 = vunpack.c.l.b16 %v224
    %v759 = vunpack.c.h.b16 %v224
    %v760 = vunpack.c.l.b16 %v225
    %v761 = vunpack.c.h.b16 %v225
    %v762 = vunpack.c.l.b16 %v226
    %v763 = vunpack.c.h.b16 %v226
    %v764 = vunpack.c.l.b16 %v227
    %v765 = vunpack.c.h.b16 %v227
    %v766 = vunpack.c.l.b16 %v228
    %v767 = vunpack.c.h.b16 %v228
    %v768 = vunpack.c.l.b16 %v229
    %v769 = vunpack.c.h.b16 %v229
    %v770 = vunpack.c.l.b16 %v230
    %v771 = vunpack.c.h.b16 %v230
    %v772 = vunpack.c.l.b16 %v231
    %v773 = vunpack.c.h.b16 %v231
    %v774 = vunpack.c.l.b16 %v232
    %v775 = vunpack.c.h.b16 %v232
    %v776 = vunpack.c.l.b16 %v233
    %v777 = vunpack.c.h.b16 %v233
    %v778 = vunpack.c.l.b16 %v234
    %v779 = vunpack.c.h.b16 %v234
    %v780 = vunpack.c.l.b16 %v235
    %v781 = vunpack.c.h.b16 %v235
    %v782 = vunpack.c.l.b16 %v236
    %v783 = vunpack.c.h.b16 %v236
    %v784 = vunpack.c.l.b16 %v237
    %v785 = vunpack.c.h.b16 %v237
    %v786 = vunpack.c.l.b16 %v238
    %v787 = vunpack.c.h.b16 %v238
    %v788 = vunpack.c.l.b16 %v239
    %v789 = vunpack.c.h.b16 %v239
    %v790 = vunpack.c.l.b16 %v240
    %v791 = vunpack.c.h.b16 %v240
    %v792 = vunpack.c.l.b16 %v241
    %v793 = vunpack.c.h.b16 %v241
    %v794 = vunpack.c.l.b16 %v242
    %v795 = vunpack.c.h.b16 %v242
    %v796 = vunpack.c.l.b16 %v243
    %v797 = vunpack.c.h.b16 %v243
    %v798 = vunpack.c.l.b16 %v244
    %v799 = vunpack.c.h.b16 %v244
    %v800 = vunpack.c.l.b16 %v245
    %v801 = vunpack.c.h.b16 %v245
    %v802 = vunpack.c.l.b16 %v246
    %v803 = vunpack.c.h.b16 %v246
    %v804 = vunpack.c.l.b16 %v247
    %v805 = vunpack.c.h.b16 %v247
    %v806 = vunpack.c.l.b16 %v248
    %v807 = vunpack.c.h.b16 %v248
    %v808 = vunpack.c.l.b16 %v249
    %v809 = vunpack.c.h.b16 %v249
    %v810 = vunpack.c.l.b16 %v250
    %v811 = vunpack.c.h.b16 %v250
    %v812 = vunpack.c.l.b16 %v251
    %v813 = vunpack.c.h.b16 %v251
    %v814 = vunpack.c.l.b16 %v252
    %v815 = vunpack.c.h.b16 %v252
    %v816 = vunpack.c.l.b16 %v253
    %v817 = vunpack.c.h.b16 %v253
    %v818 = vunpack.c.l.b16 %v254
    %v819 = vunpack.c.h.b16 %v254
    %v820 = vunpack.c.l.b16 %v255
    %v821 = vunpack.c.h.b16 %v255
    %v822 = vunpack.c.l.b16 %v256
    %v823 = vunpack.c.h.b16 %v256
    %v824 = vunpack.c.l.b16 %v257
    %v825 = vunpack.c.h.b16 %v257
    %v826 = vunpack.c.l.b16 %v258
    %v827 = vunpack.c.h.b16 %v258
    %v828 = vunpack.c.l.b16 %v259
    %v829 = vunpack.c.h.b16 %v259
    %v830 = vunpack.c.l.b16 %v260
    %v831 = vunpack.c.h.b16 %v260
    %v832 = vunpack.c.l.b16 %v261
    %v833 = vunpack.c.h.b16 %v261
    %v834 = vunpack.c.l.b16 %v262
    %v835 = vunpack.c.h.b16 %v262
    %v836 = vunpack.c.l.b16 %v263
    %v837 = vunpack.c.h.b16 %v263
    %v838 = vunpack.c.l.b16 %v264
    %v839 = vunpack.c.h.b16 %v264
    %v840 = vunpack.c.l.b16 %v265
    %v841 = vunpack.c.h.b16 %v265
    %v842 = vunpack.c.l.b16 %v266
    %v843 = vunpack.c.h.b16 %v266
    %v844 = vunpack.c.l.b16 %v267
    %v845 = vunpack.c.h.b16 %v267
    %v846 = vunpack.c.l.b16 %v268
    %v847 = vunpack.c.h.b16 %v268
    %v848 = vunpack.c.l.b16 %v269
    %v849 = vunpack.c.h.b16 %v269
    %v850 = vunpack.c.l.b16 %v270
    %v851 = vunpack.c.h.b16 %v270
    %v852 = vunpack.c.l.b16 %v271
    %v853 = vunpack.c.h.b16 %v271
    %v854 = vunpack.c.l.b16 %v272
    %v855 = vunpack.c.h.b16 %v272
    %v856 = vunpack.c.l.b16 %v273
    %v857 = vunpack.c.h.b16 %v273
    %v858 = vunpack.c.l.b16 %v274
    %v859 = vunpack.c.h.b16 %v274
    %v860 = vunpack.c.l.b16 %v275
    %v861 = vunpack.c.h.b16 %v275
    %v862 = vunpack.c.l.b16 %v276
    %v863 = vunpack.c.h.b16 %v276
    %v864 = vunpack.c.l.b16 %v277
    %v865 = vunpack.c.h.b16 %v277
    %v866 = vunpack.c.l.b16 %v278
    %v867 = vunpack.c.h.b16 %v278
    %v868 = vunpack.c.l.b16 %v279
    %v869 = vunpack.c.h.b16 %v279
    %v870 = vunpack.c.l.b16 %v280
    %v871 = vunpack.c.h.b16 %v280
    %v872 = vunpack.c.l.b16 %v281
    %v873 = vunpack.c.h.b16 %v281
    %v874 = vunpack.c.l.b16 %v282
    %v875 = vunpack.c.h.b16 %v282
    %v876 = vunpack.c.l.b16 %v283
    %v877 = vunpack.c.h.b16 %v283
    %v878 = vunpack.c.l.b16 %v284
    %v879 = vunpack.c.h.b16 %v284
    %v880 = vunpack.c.l.b16 %v285
    %v881 = vunpack.c.h.b16 %v285
    %v882 = vunpack.c.l.b16 %v286
    %v883 = vunpack.c.h.b16 %v286
    %v884 = vunpack.c.l.b16 %v287
    %v885 = vunpack.c.h.b16 %v287
    %v886 = vunpack.c.l.b16 %v288
    %v887 = vunpack.c.h.b16 %v288
    %v888 = vunpack.c.l.b16 %v289
    %v889 = vunpack.c.h.b16 %v289
    %v890 = vunpack.c.l.b16 %v290
    %v891 = vunpack.c.h.b16 %v290
    %v892 = vunpack.c.l.b16 %v291
    %v893 = vunpack.c.h.b16 %v291
    %v894 = vunpack.c.l.b16 %v292
    %v895 = vunpack.c.h.b16 %v292
    %v896 = vunpack.c.l.b16 %v293
    %v897 = vunpack.c.h.b16 %v293
    %v898 = vunpack.c.l.b16 %v294
    %v899 = vunpack.c.h.b16 %v294
    %v900 = vunpack.c.l.b16 %v295
    %v901 = vunpack.c.h.b16 %v295
    %v902 = vunpack.c.l.b16 %v296
    %v903 = vunpack.c.h.b16 %v296
    %v904 = vunpack.c.l.b16 %v297
    %v905 = vunpack.c.h.b16 %v297
    %v906 = vunpack.c.l.b16 %v298
    %v907 = vunpack.c.h.b16 %v298
    %v908 = vunpack.c.l.b16 %v299
    %v909 = vunpack.c.h.b16 %v299
    %v910 = vunpack.c.l.b16 %v300
    %v911 = vunpack.c.h.b16 %v300
    %v912 = vunpack.c.l.b16 %v301
    %v913 = vunpack.c.h.b16 %v301
    %v914 = vunpack.c.l.b16 %v302
    %v915 = vunpack.c.h.b16 %v302
    %v916 = vunpack.c.l.b16 %v303
    %v917 = vunpack.c.h.b16 %v303
    %v918 = vunpack.c.l.b16 %v304
    %v919 = vunpack.c.h.b16 %v304
    %v920 = vunpack.c.l.b16 %v305
    %v921 = vunpack.c.h.b16 %v305
    %v922 = vunpack.c.l.b16 %v306
    %v923 = vunpack.c.h.b16 %v306
    %v924 = vunpack.c.l.b16 %v307
    %v925 = vunpack.c.h.b16 %v307
    %v926 = vunpack.c.l.b16 %v308
    %v927 = vunpack.c.h.b16 %v308
    %v928 = vunpack.c.l.b16 %v309
    %v929 = vunpack.c.h.b16 %v309
    %v930 = vunpack.c.l.b16 %v310
    %v931 = vunpack.c.h.b16 %v310
    %v932 = vunpack.c.l.b16 %v311
    %v933 = vunpack.c.h.b16 %v311
    %v934 = vunpack.c.l.b16 %v312
    %v935 = vunpack.c.h.b16 %v312
    %v936 = vunpack.c.l.b16 %v313
    %v937 = vunpack.c.h.b16 %v313
    %v938 = vunpack.c.l.b16 %v314
    %v939 = vunpack.c.h.b16 %v314
    %v940 = vunpack.c.l.b16 %v315
    %v941 = vunpack.c.h.b16 %v315
    %v942 = vunpack.c.l.b16 %v316
    %v943 = vunpack.c.h.b16 %v316
    %v944 = vunpack.c.l.b16 %v317
    %v945 = vunpack.c.h.b16 %v317
    %v946 = vunpack.c.l.b16 %v318
    %v947 = vunpack.c.h.b16 %v318
    %v948 = vunpack.c.l.b16 %v319
    %v949 = vunpack.c.h.b16 %v319
    %v950 = vunpack.c.l.b16 %v320
    %v951 = vunpack.c.h.b16 %v320
    %v952 = vunpack.c.l.b16 %v321
    %v953 = vunpack.c.h.b16 %v321
    %v954 = vunpack.c.l.b16 %v322
    %v955 = vunpack.c.h.b16 %v322
    %v956 = vunpack.c.l.b16 %v323
    %v957 = vunpack.c.h.b16 %v323
    %v958 = vunpack.c.l.b16 %v324
    %v959 = vunpack.c.h.b16 %v324
    %v960 = vunpack.c.l.b16 %v325
    %v961 = vunpack.c.h.b16 %v325
    %v962 = vunpack.c.l.b16 %v326
    %v963 = vunpack.c.h.b16 %v326
    %v964 = vunpack.c.l.b16 %v327
    %v965 = vunpack.c.h.b16 %v327
    %v966 = vunpack.c.l.b16 %v328
    %v967 = vunpack.c.h.b16 %v328
    %v968 = vunpack.c.l.b16 %v329
    %v969 = vunpack.c.h.b16 %v329
    %v970 = vunpack.c.l.b16 %v330
    %v971 = vunpack.c.h.b16 %v330
    %v972 = vunpack.c.l.b16 %v331
    %v973 = vunpack.c.h.b16 %v331
    %v974 = vunpack.c.l.b16 %v332
    %v975 = vunpack.c.h.b16 %v332
    %v976 = vunpack.c.l.b16 %v333
    %v977 = vunpack.c.h.b16 %v333
    %v978 = vunpack.c.l.b16 %v334
    %v979 = vunpack.c.h.b16 %v334
    %v980 = vunpack.c.l.b16 %v335
    %v981 = vunpack.c.h.b16 %v335
    %v982 = vunpack.c.l.b16 %v336
    %v983 = vunpack.c.h.b16 %v336
    %v984 = vunpack.c.l.b16 %v337
    %v985 = vunpack.c.h.b16 %v337
    %v986 = vunpack.c.l.b16 %v338
    %v987 = vunpack.c.h.b16 %v338
    %v988 = vunpack.c.l.b16 %v339
    %v989 = vunpack.c.h.b16 %v339
    %v990 = vunpack.c.l.b16 %v340
    %v991 = vunpack.c.h.b16 %v340
    %v992 = vunpack.c.l.b16 %v341
    %v993 = vunpack.c.h.b16 %v341
    %v994 = vunpack.c.l.b16 %v342
    %v995 = vunpack.c.h.b16 %v342
    %v996 = vunpack.c.l.b16 %v343
    %v997 = vunpack.c.h.b16 %v343
    %v998 = vunpack.c.l.b16 %v344
    %v999 = vunpack.c.h.b16 %v344
    %v1000 = vunpack.c.l.b16 %v345
    %v1001 = vunpack.c.h.b16 %v345
    %v1002 = vunpack.c.l.b16 %v346
    %v1003 = vunpack.c.h.b16 %v346
    %v1004 = vunpack.c.l.b16 %v347
    %v1005 = vunpack.c.h.b16 %v347
    %v1006 = vunpack.c.l.b16 %v348
    %v1007 = vunpack.c.h.b16 %v348
    %v1008 = vunpack.c.l.b16 %v349
    %v1009 = vunpack.c.h.b16 %v349
    %v1010 = vunpack.c.l.b16 %v350
    %v1011 = vunpack.c.h.b16 %v350
    %v1012 = vunpack.c.l.b16 %v351
    %v1013 = vunpack.c.h.b16 %v351
    %v1014 = vunpack.c.l.b16 %v352
    %v1015 = vunpack.c.h.b16 %v352
    %v1016 = vunpack.c.l.b16 %v353
    %v1017 = vunpack.c.h.b16 %v353
    %v1018 = vunpack.c.l.b16 %v354
    %v1019 = vunpack.c.h.b16 %v354
    %v1020 = vunpack.c.l.b16 %v355
    %v1021 = vunpack.c.h.b16 %v355
    %v1022 = vunpack.c.l.b16 %v356
    %v1023 = vunpack.c.h.b16 %v356
    %v1024 = vunpack.c.l.b16 %v357
    %v1025 = vunpack.c.h.b16 %v357
    %v1026 = vunpack.c.l.b16 %v358
    %v1027 = vunpack.c.h.b16 %v358
    %v1028 = vunpack.c.l.b16 %v359
    %v1029 = vunpack.c.h.b16 %v359
    %v1030 = vunpack.c.l.b16 %v360
    %v1031 = vunpack.c.h.b16 %v360
    %v1032 = vunpack.c.l.b16 %v361
    %v1033 = vunpack.c.h.b16 %v361
    %v1034 = vunpack.c.l.b16 %v362
    %v1035 = vunpack.c.h.b16 %v362
    %v1036 = vunpack.c.l.b16 %v363
    %v1037 = vunpack.c.h.b16 %v363
    %v1038 = vunpack.c.l.b16 %v364
    %v1039 = vunpack.c.h.b16 %v364
    %v1040 = vunpack.c.l.b16 %v365
    %v1041 = vunpack.c.h.b16 %v365
    %v1042 = vunpack.c.l.b16 %v366
    %v1043 = vunpack.c.h.b16 %v366
    %v1044 = vunpack.c.l.b16 %v367
    %v1045 = vunpack.c.h.b16 %v367
    %v1046 = vunpack.c.l.b16 %v368
    %v1047 = vunpack.c.h.b16 %v368
    %v1048 = vunpack.c.l.b16 %v369
    %v1049 = vunpack.c.h.b16 %v369
    %v1050 = vunpack.c.l.b16 %v370
    %v1051 = vunpack.c.h.b16 %v370
    %v1052 = vunpack.c.l.b16 %v371
    %v1053 = vunpack.c.h.b16 %v371
    %v1054 = vunpack.c.l.b16 %v372
    %v1055 = vunpack.c.h.b16 %v372
    %v1056 = vunpack.c.l.b16 %v373
    %v1057 = vunpack.c.h.b16 %v373
    %v1058 = vunpack.c.l.b16 %v374
    %v1059 = vunpack.c.h.b16 %v374
    %v1060 = vunpack.c.l.b16 %v375
    %v1061 = vunpack.c.h.b16 %v375
    %v1062 = vunpack.c.l.b16 %v376
    %v1063 = vunpack.c.h.b16 %v376
    %v1064 = vunpack.c.l.b16 %v377
    %v1065 = vunpack.c.h.b16 %v377
    %v1066 = vunpack.c.l.b16 %v378
    %v1067 = vunpack.c.h.b16 %v378
    %v1068 = vunpack.c.l.b16 %v379
    %v1069 = vunpack.c.h.b16 %v379
    %v1070 = vunpack.c.l.b16 %v380
    %v1071 = vunpack.c.h.b16 %v380
    %v1072 = vunpack.c.l.b16 %v381
    %v1073 = vunpack.c.h.b16 %v381
    %v1074 = vunpack.c.l.b16 %v382
    %v1075 = vunpack.c.h.b16 %v382
    %v1076 = vunpack.c.l.b16 %v383
    %v1077 = vunpack.c.h.b16 %v383
    %v1078 = vunpack.c.l.b16 %v384
    %v1079 = vunpack.c.h.b16 %v384
    %v1080 = vunpack.c.l.b16 %v385
    %v1081 = vunpack.c.h.b16 %v385
    %v1082 = vunpack.c.l.b16 %v386
    %v1083 = vunpack.c.h.b16 %v386
    %v1084 = vunpack.c.l.b16 %v387
    %v1085 = vunpack.c.h.b16 %v387
    %v1086 = vunpack.c.l.b16 %v388
    %v1087 = vunpack.c.h.b16 %v388
    %v1088 = vunpack.c.l.b16 %v389
    %v1089 = vunpack.c.h.b16 %v389
    %v1090 = vunpack.c.l.b16 %v390
    %v1091 = vunpack.c.h.b16 %v390
    %v1092 = vunpack.c.l.b16 %v391
    %v1093 = vunpack.c.h.b16 %v391
    %v1094 = vunpack.c.l.b16 %v392
    %v1095 = vunpack.c.h.b16 %v392
    %v1096 = vunpack.c.l.b16 %v393
    %v1097 = vunpack.c.h.b16 %v393
    %v1098 = vunpack.c.l.b16 %v394
    %v1099 = vunpack.c.h.b16 %v394
    %v1100 = vunpack.c.l.b16 %v395
    %v1101 = vunpack.c.h.b16 %v395
    %v1102 = vunpack.c.l.b16 %v396
    %v1103 = vunpack.c.h.b16 %v396
    %v1104 = vunpack.c.l.b16 %v397
    %v1105 = vunpack.c.h.b16 %v397
    %v1106 = vunpack.c.l.b16 %v398
    %v1107 = vunpack.c.h.b16 %v398
    %v1108 = vunpack.c.l.b16 %v399
    %v1109 = vunpack.c.h.b16 %v399
    %v1110 = vunpack.c.l.b16 %v400
    %v1111 = vunpack.c.h.b16 %v400
    %v1112 = vunpack.c.l.b16 %v401
    %v1113 = vunpack.c.h.b16 %v401
    %v1114 = vunpack.c.l.b16 %v402
    %v1115 = vunpack.c.h.b16 %v402
    %v1116 = vunpack.c.l.b16 %v403
    %v1117 = vunpack.c.h.b16 %v403
    %v1118 = vunpack.c.l.b16 %v404
    %v1119 = vunpack.c.h.b16 %v404
    %v1120 = vunpack.c.l.b16 %v405
    %v1121 = vunpack.c.h.b16 %v405
    %v1122 = vunpack.c.l.b16 %v406
    %v1123 = vunpack.c.h.b16 %v406
    %v1124 = vunpack.c.l.b16 %v407
    %v1125 = vunpack.c.h.b16 %v407
    %v1126 = vunpack.c.l.b16 %v408
    %v1127 = vunpack.c.h.b16 %v408
    %v1128 = vunpack.c.l.b16 %v409
    %v1129 = vunpack.c.h.b16 %v409
    %v1130 = vunpack.c.l.b16 %v410
    %v1131 = vunpack.c.h.b16 %v410
    %v1132 = vunpack.c.l.b16 %v411
    %v1133 = vunpack.c.h.b16 %v411
    %v1134 = vunpack.c.l.b16 %v412
    %v1135 = vunpack.c.h.b16 %v412
    %v1136 = vunpack.c.l.b16 %v413
    %v1137 = vunpack.c.h.b16 %v413
    %v1138 = vunpack.c.l.b16 %v414
    %v1139 = vunpack.c.h.b16 %v414
    %v1140 = vunpack.c.l.b16 %v415
    %v1141 = vunpack.c.h.b16 %v415
    %v1142 = vunpack.c.l.b16 %v416
    %v1143 = vunpack.c.h.b16 %v416
    %v1144 = vunpack.c.l.b16 %v417
    %v1145 = vunpack.c.h.b16 %v417
    %v1146 = vunpack.c.l.b16 %v418
    %v1147 = vunpack.c.h.b16 %v418
    %v1148 = vunpack.c.l.b16 %v419
    %v1149 = vunpack.c.h.b16 %v419
    %v1150 = vunpack.c.l.b16 %v420
    %v1151 = vunpack.c.h.b16 %v420
    %v1152 = vunpack.c.l.b16 %v421
    %v1153 = vunpack.c.h.b16 %v421
    %v1154 = vunpack.c.l.b16 %v422
    %v1155 = vunpack.c.h.b16 %v422
    %v1156 = vunpack.c.l.b16 %v423
    %v1157 = vunpack.c.h.b16 %v423
    %v1158 = vunpack.c.l.b16 %v424
    %v1159 = vunpack.c.h.b16 %v424
    %v1160 = vunpack.c.l.b16 %v425
    %v1161 = vunpack.c.h.b16 %v425
    %v1162 = vunpack.c.l.b16 %v426
    %v1163 = vunpack.c.h.b16 %v426
    %v1164 = vunpack.c.l.b16 %v427
    %v1165 = vunpack.c.h.b16 %v427
    %v1166 = vunpack.c.l.b16 %v428
    %v1167 = vunpack.c.h.b16 %v428
    %v1168 = vunpack.c.l.b16 %v429
    %v1169 = vunpack.c.h.b16 %v429
    %v1170 = vunpack.c.l.b16 %v430
    %v1171 = vunpack.c.h.b16 %v430
    %v1172 = vunpack.c.l.b16 %v431
    %v1173 = vunpack.c.h.b16 %v431
    %v1174 = vunpack.c.l.b16 %v432
    %v1175 = vunpack.c.h.b16 %v432
    %v1176 = vunpack.c.l.b16 %v433
    %v1177 = vunpack.c.h.b16 %v433
    %v1178 = vunpack.c.l.b16 %v434
    %v1179 = vunpack.c.h.b16 %v434
    %v1180 = vunpack.c.l.b16 %v435
    %v1181 = vunpack.c.h.b16 %v435
    %v1182 = vunpack.c.l.b16 %v436
    %v1183 = vunpack.c.h.b16 %v436
    %v1184 = vunpack.c.l.b16 %v437
    %v1185 = vunpack.c.h.b16 %v437
    %v1186 = vunpack.c.l.b16 %v438
    %v1187 = vunpack.c.h.b16 %v438
    %v1188 = vunpack.c.l.b16 %v439
    %v1189 = vunpack.c.h.b16 %v439
    %v1190 = vunpack.c.l.b16 %v440
    %v1191 = vunpack.c.h.b16 %v440
    %v1192 = vunpack.c.l.b16 %v441
    %v1193 = vunpack.c.h.b16 %v441
    %v1194 = vunpack.c.l.b16 %v442
    %v1195 = vunpack.c.h.b16 %v442
    %v1196 = vunpack.c.l.b16 %v443
    %v1197 = vunpack.c.h.b16 %v443
    %v1198 = vunpack.c.l.b16 %v444
    %v1199 = vunpack.c.h.b16 %v444
    %v1200 = vunpack.c.l.b16 %v445
    %v1201 = vunpack.c.h.b16 %v445
    %v1202 = vunpack.c.l.b16 %v446
    %v1203 = vunpack.c.h.b16 %v446
    %v1204 = vunpack.c.l.b16 %v447
    %v1205 = vunpack.c.h.b16 %v447
    %v1206 = vunpack.c.l.b16 %v448
    %v1207 = vunpack.c.h.b16 %v448
    %v1208 = vunpack.c.l.b16 %v449
    %v1209 = vunpack.c.h.b16 %v449
    %v1210 = vunpack.c.l.b16 %v450
    %v1211 = vunpack.c.h.b16 %v450
    %v1212 = vunpack.c.l.b16 %v451
    %v1213 = vunpack.c.h.b16 %v451
    %v1214 = vunpack.c.l.b16 %v452
    %v1215 = vunpack.c.h.b16 %v452
    %v1216 = vunpack.c.l.b16 %v453
    %v1217 = vunpack.c.h.b16 %v453
    %v1218 = vunpack.c.l.b16 %v454
    %v1219 = vunpack.c.h.b16 %v454
    %v1220 = vunpack.c.l.b16 %v455
    %v1221 = vunpack.c.h.b16 %v455
    %v1222 = vunpack.c.l.b16 %v456
    %v1223 = vunpack.c.h.b16 %v456
    %v1224 = vunpack.c.l.b16 %v457
    %v1225 = vunpack.c.h.b16 %v457
    %v1226 = vunpack.c.l.b16 %v458
    %v1227 = vunpack.c.h.b16 %v458
    %v1228 = vunpack.c.l.b16 %v459
    %v1229 = vunpack.c.h.b16 %v459
    %v1230 = vunpack.c.l.b16 %v460
    %v1231 = vunpack.c.h.b16 %v460
    %v1232 = vunpack.c.l.b16 %v461
    %v1233 = vunpack.c.h.b16 %v461
    %v1234 = vunpack.c.l.b16 %v462
    %v1235 = vunpack.c.h.b16 %v462
    %v1236 = vunpack.c.l.b16 %v463
    %v1237 = vunpack.c.h.b16 %v463
    %v1238 = vunpack.c.l.b16 %v464
    %v1239 = vunpack.c.h.b16 %v464
    %v1240 = vunpack.c.l.b16 %v465
    %v1241 = vunpack.c.h.b16 %v465
    %v1242 = vunpack.c.l.b16 %v466
    %v1243 = vunpack.c.h.b16 %v466
    %v1244 = vunpack.c.l.b16 %v467
    %v1245 = vunpack.c.h.b16 %v467
    %v1246 = vpack.c.b16 %v738, %v734
    %v1247 = vpack.c.b16 %v739, %v735
    %v1248 = vpack.c.b16 %v740, %v736
    %v1249 = vpack.c.b16 %v741, %v737
    %v1250 = vpack.c.b16 %v746, %v742
    %v1251 = vpack.c.b16 %v747, %v743
    %v1252 = vpack.c.b16 %v748, %v744
    %v1253 = vpack.c.b16 %v749, %v745
    %v1254 = vpack.c.b16 %v754, %v750
    %v1255 = vpack.c.b16 %v755, %v751
    %v1256 = vpack.c.b16 %v756, %v752
    %v1257 = vpack.c.b16 %v757, %v753
    %v1258 = vpack.c.b16 %v762, %v758
    %v1259 = vpack.c.b16 %v763, %v759
    %v1260 = vpack.c.b16 %v764, %v760
    %v1261 = vpack.c.b16 %v765, %v761
    %v1262 = vpack.c.b16 %v770, %v766
    %v1263 = vpack.c.b16 %v771, %v767
    %v1264 = vpack.c.b16 %v772, %v768
    %v1265 = vpack.c.b16 %v773, %v769
    %v1266 = vpack.c.b16 %v778, %v774
    %v1267 = vpack.c.b16 %v779, %v775
    %v1268 = vpack.c.b16 %v780, %v776
    %v1269 = vpack.c.b16 %v781, %v777
    %v1270 = vpack.c.b16 %v786, %v782
    %v1271 = vpack.c.b16 %v787, %v783
    %v1272 = vpack.c.b16 %v788, %v784
    %v1273 = vpack.c.b16 %v789, %v785
    %v1274 = vpack.c.b16 %v794, %v790
    %v1275 = vpack.c.b16 %v795, %v791
    %v1276 = vpack.c.b16 %v796, %v792
    %v1277 = vpack.c.b16 %v797, %v793
    %v1278 = vpack.c.b16 %v802, %v798
    %v1279 = vpack.c.b16 %v803, %v799
    %v1280 = vpack.c.b16 %v804, %v800
    %v1281 = vpack.c.b16 %v805, %v801
    %v1282 = vpack.c.b16 %v810, %v806
    %v1283 = vpack.c.b16 %v811, %v807
    %v1284 = vpack.c.b16 %v812, %v808
    %v1285 = vpack.c.b16 %v813, %v809
    %v1286 = vpack.c.b16 %v818, %v814
    %v1287 = vpack.c.b16 %v819, %v815
    %v1288 = vpack.c.b16 %v820, %v816
    %v1289 = vpack.c.b16 %v821, %v817
    %v1290 = vpack.c.b16 %v826, %v822
    %v1291 = vpack.c.b16 %v827, %v823
    %v1292 = vpack.c.b16 %v828, %v824
    %v1293 = vpack.c.b16 %v829, %v825
    %v1294 = vpack.c.b16 %v834, %v830
    %v1295 = vpack.c.b16 %v835, %v831
    %v1296 = vpack.c.b16 %v836, %v832
    %v1297 = vpack.c.b16 %v837, %v833
    %v1298 = vpack.c.b16 %v842, %v838
    %v1299 = vpack.c.b16 %v843, %v839
    %v1300 = vpack.c.b16 %v844, %v840
    %v1301 = vpack.c.b16 %v845, %v841
    %v1302 = vpack.c.b16 %v850, %v846
    %v1303 = vpack.c.b16 %v851, %v847
    %v1304 = vpack.c.b16 %v852, %v848
    %v1305 = vpack.c.b16 %v853, %v849
    %v1306 = vpack.c.b16 %v858, %v854
    %v1307 = vpack.c.b16 %v859, %v855
    %v1308 = vpack.c.b16 %v860, %v856
    %v1309 = vpack.c.b16 %v861, %v857
    %v1310 = vpack.c.b16 %v866, %v862
    %v1311 = vpack.c.b16 %v867, %v863
    %v1312 = vpack.c.b16 %v868, %v864
    %v1313 = vpack.c.b16 %v869, %v865
    %v1314 = vpack.c.b16 %v874, %v870
    %v1315 = vpack.c.b16 %v875, %v871
    %v1316 = vpack.c.b16 %v876, %v872
    %v1317 = vpack.c.b16 %v877, %v873
    %v1318 = vpack.c.b16 %v882, %v878
    %v1319 = vpack.c.b16 %v883, %v879
    %v1320 = vpack.c.b16 %v884, %v880
    %v1321 = vpack.c.b16 %v885, %v881
    %v1322 = vpack.c.b16 %v890, %v886
    %v1323 = vpack.c.b16 %v891, %v887
    %v1324 = vpack.c.b16 %v892, %v888
    %v1325 = vpack.c.b16 %v893, %v889
    %v1326 = vpack.c.b16 %v898, %v894
    %v1327 = vpack.c.b16 %v899, %v895
    %v1328 = vpack.c.b16 %v900, %v896
    %v1329 = vpack.c.b16 %v901, %v897
    %v1330 = vpack.c.b16 %v906, %v902
    %v1331 = vpack.c.b16 %v907, %v903
    %v1332 = vpack.c.b16 %v908, %v904
    %v1333 = vpack.c.b16 %v909, %v905
    %v1334 = vpack.c.b16 %v914, %v910
    %v1335 = vpack.c.b16 %v915, %v911
    %v1336 = vpack.c.b16 %v916, %v912
    %v1337 = vpack.c.b16 %v917, %v913
    %v1338 = vpack.c.b16 %v922, %v918
    %v1339 = vpack.c.b16 %v923, %v919
    %v1340 = vpack.c.b16 %v924, %v920
    %v1341 = vpack.c.b16 %v925, %v921
    %v1342 = vpack.c.b16 %v930, %v926
    %v1343 = vpack.c.b16 %v931, %v927
    %v1344 = vpack.c.b16 %v932, %v928
    %v1345 = vpack.c.b16 %v933, %v929
    %v1346 = vpack.c.b16 %v938, %v934
    %v1347 = vpack.c.b16 %v939, %v935
    %v1348 = vpack.c.b16 %v940, %v936
    %v1349 = vpack.c.b16 %v941, %v937
    %v1350 = vpack.c.b16 %v946, %v942
    %v1351 = vpack.c.b16 %v947, %v943
    %v1352 = vpack.c.b16 %v948, %v944
    %v1353 = vpack.c.b16 %v949, %v945
    %v1354 = vpack.c.b16 %v954, %v950
    %v1355 = vpack.c.b16 %v955, %v951
    %v1356 = vpack.c.b16 %v956, %v952
    %v1357 = vpack.c.b16 %v957, %v953
    %v1358 = vpack.c.b16 %v962, %v958
    %v1359 = vpack.c.b16 %v963, %v959
    %v1360 = vpack.c.b16 %v964, %v960
    %v1361 = vpack.c.b16 %v965, %v961
    %v1362 = vpack.c.b16 %v970, %v966
    %v1363 = vpack.c.b16 %v971, %v967
    %v1364 = vpack.c.b16 %v972, %v968
    %v1365 = vpack.c.b16 %v973, %v969
    %v1366 = vpack.c.b16 %v978, %v974
    %v1367 = vpack.c.b16 %v979, %v975
    %v1368 = vpack.c.b16 %v980, %v976
    %v1369 = vpack.c.b16 %v981, %v977
    %v1370 = vpack.c.b16 %v986, %v982
    %v1371 = vpack.c.b16 %v987, %v983
    %v1372 = vpack.c.b16 %v988, %v984
    %v1373 = vpack.c.b16 %v989, %v985
    %v1374 = vpack.c.b16 %v994, %v990
    %v1375 = vpack.c.b16 %v995, %v991
    %v1376 = vpack.c.b16 %v996, %v992
    %v1377 = vpack.c.b16 %v997, %v993
    %v1378 = vpack.c.b16 %v1002, %v998
    %v1379 = vpack.c.b16 %v1003, %v999
    %v1380 = vpack.c.b16 %v1004, %v1000
    %v1381 = vpack.c.b16 %v1005, %v1001
    %v1382 = vpack.c.b16 %v1010, %v1006
    %v1383 = vpack.c.b16 %v1011, %v1007
    %v1384 = vpack.c.b16 %v1012, %v1008
    %v1385 = vpack.c.b16 %v1013, %v1009
    %v1386 = vpack.c.b16 %v1018, %v1014
    %v1387 = vpack.c.b16 %v1019, %v1015
    %v1388 = vpack.c.b16 %v1020, %v1016
    %v1389 = vpack.c.b16 %v1021, %v1017
    %v1390 = vpack.c.b16 %v1026, %v1022
    %v1391 = vpack.c.b16 %v1027, %v1023
    %v1392 = vpack.c.b16 %v1028, %v1024
    %v1393 = vpack.c.b16 %v1029, %v1025
    %v1394 = vpack.c.b16 %v1034, %v1030
    %v1395 = vpack.c.b16 %v1035, %v1031
    %v1396 = vpack.c.b16 %v1036, %v1032
    %v1397 = vpack.c.b16 %v1037, %v1033
    %v1398 = vpack.c.b16 %v1042, %v1038
    %v1399 = vpack.c.b16 %v1043, %v1039
    %v1400 = vpack.c.b16 %v1044, %v1040
    %v1401 = vpack.c.b16 %v1045, %v1041
    %v1402 = vpack.c.b16 %v1050, %v1046
    %v1403 = vpack.c.b16 %v1051, %v1047
    %v1404 = vpack.c.b16 %v1052, %v1048
    %v1405 = vpack.c.b16 %v1053, %v1049
    %v1406 = vpack.c.b16 %v1058, %v1054
    %v1407 = vpack.c.b16 %v1059, %v1055
    %v1408 = vpack.c.b16 %v1060, %v1056
    %v1409 = vpack.c.b16 %v1061, %v1057
    %v1410 = vpack.c.b16 %v1066, %v1062
    %v1411 = vpack.c.b16 %v1067, %v1063
    %v1412 = vpack.c.b16 %v1068, %v1064
    %v1413 = vpack.c.b16 %v1069, %v1065
    %v1414 = vpack.c.b16 %v1074, %v1070
    %v1415 = vpack.c.b16 %v1075, %v1071
    %v1416 = vpack.c.b16 %v1076, %v1072
    %v1417 = vpack.c.b16 %v1077, %v1073
    %v1418 = vpack.c.b16 %v1082, %v1078
    %v1419 = vpack.c.b16 %v1083, %v1079
    %v1420 = vpack.c.b16 %v1084, %v1080
    %v1421 = vpack.c.b16 %v1085, %v1081
    %v1422 = vpack.c.b16 %v1090, %v1086
    %v1423 = vpack.c.b16 %v1091, %v1087
    %v1424 = vpack.c.b16 %v1092, %v1088
    %v1425 = vpack.c.b16 %v1093, %v1089
    %v1426 = vpack.c.b16 %v1098, %v1094
    %v1427 = vpack.c.b16 %v1099, %v1095
    %v1428 = vpack.c.b16 %v1100, %v1096
    %v1429 = vpack.c.b16 %v1101, %v1097
    %v1430 = vpack.c.b16 %v1106, %v1102
    %v1431 = vpack.c.b16 %v1107, %v1103
    %v1432 = vpack.c.b16 %v1108, %v1104
    %v1433 = vpack.c.b16 %v1109, %v1105
    %v1434 = vpack.c.b16 %v1114, %v1110
    %v1435 = vpack.c.b16 %v1115, %v1111
    %v1436 = vpack.c.b16 %v1116, %v1112
    %v1437 = vpack.c.b16 %v1117, %v1113
    %v1438 = vpack.c.b16 %v1122, %v1118
    %v1439 = vpack.c.b16 %v1123, %v1119
    %v1440 = vpack.c.b16 %v1124, %v1120
    %v1441 = vpack.c.b16 %v1125, %v1121
    %v1442 = vpack.c.b16 %v1130, %v1126
    %v1443 = vpack.c.b16 %v1131, %v1127
    %v1444 = vpack.c.b16 %v1132, %v1128
    %v1445 = vpack.c.b16 %v1133, %v1129
    %v1446 = vpack.c.b16 %v1138, %v1134
    %v1447 = vpack.c.b16 %v1139, %v1135
    %v1448 = vpack.c.b16 %v1140, %v1136
    %v1449 = vpack.c.b16 %v1141, %v1137
    %v1450 = vpack.c.b16 %v1146, %v1142
    %v1451 = vpack.c.b16 %v1147, %v1143
    %v1452 = vpack.c.b16 %v1148, %v1144
    %v1453 = vpack.c.b16 %v1149, %v1145
    %v1454 = vpack.c.b16 %v1154, %v1150
    %v1455 = vpack.c.b16 %v1155, %v1151
    %v1456 = vpack.c.b16 %v1156, %v1152
    %v1457 = vpack.c.b16 %v1157, %v1153
    %v1458 = vpack.c.b16 %v1162, %v1158
    %v1459 = vpack.c.b16 %v1163, %v1159
    %v1460 = vpack.c.b16 %v1164, %v1160
    %v1461 = vpack.c.b16 %v1165, %v1161
    %v1462 = vpack.c.b16 %v1170, %v1166
    %v1463 = vpack.c.b16 %v1171, %v1167
    %v1464 = vpack.c.b16 %v1172, %v1168
    %v1465 = vpack.c.b16 %v1173, %v1169
    %v1466 = vpack.c.b16 %v1178, %v1174
    %v1467 = vpack.c.b16 %v1179, %v1175
    %v1468 = vpack.c.b16 %v1180, %v1176
    %v1469 = vpack.c.b16 %v1181, %v1177
    %v1470 = vpack.c.b16 %v1186, %v1182
    %v1471 = vpack.c.b16 %v1187, %v1183
    %v1472 = vpack.c.b16 %v1188, %v1184
    %v1473 = vpack.c.b16 %v1189, %v1185
    %v1474 = vpack.c.b16 %v1194, %v1190
    %v1475 = vpack.c.b16 %v1195, %v1191
    %v1476 = vpack.c.b16 %v1196, %v1192
    %v1477 = vpack.c.b16 %v1197, %v1193
    %v1478 = vpack.c.b16 %v1202, %v1198
    %v1479 = vpack.c.b16 %v1203, %v1199
    %v1480 = vpack.c.b16 %v1204, %v1200
    %v1481 = vpack.c.b16 %v1205, %v1201
    %v1482 = vpack.c.b16 %v1210, %v1206
    %v1483 = vpack.c.b16 %v1211, %v1207
    %v1484 = vpack.c.b16 %v1212, %v1208
    %v1485 = vpack.c.b16 %v1213, %v1209
    %v1486 = vpack.c.b16 %v1218, %v1214
    %v1487 = vpack.c.b16 %v1219, %v1215
    %v1488 = vpack.c.b16 %v1220, %v1216
    %v1489 = vpack.c.b16 %v1221, %v1217
    %v1490 = vpack.c.b16 %v1226, %v1222
    %v1491 = vpack.c.b16 %v1227, %v1223
    %v1492 = vpack.c.b16 %v1228, %v1224
    %v1493 = vpack.c.b16 %v1229, %v1225
    %v1494 = vpack.c.b16 %v1234, %v1230
    %v1495 = vpack.c.b16 %v1235, %v1231
    %v1496 = vpack.c.b16 %v1236, %v1232
    %v1497 = vpack.c.b16 %v1237, %v1233
    %v1498 = vpack.c.b16 %v1242, %v1238
    %v1499 = vpack.c.b16 %v1243, %v1239
    %v1500 = vpack.c.b16 %v1244, %v1240
    %v1501 = vpack.c.b16 %v1245, %v1241
    %1758 = vmatpush.bf16.msra.mxu0 %v1274
    %1759 = vmatpush.bf16.msra.mxu0 %v1270
    %1760 = vmatpush.bf16.msra.mxu0 %v1266
    %1761 = vmatpush.bf16.msra.mxu0 %v1262
    %1762 = vmatpush.bf16.msra.mxu0 %v1258
    %1763 = vmatpush.bf16.msra.mxu0 %v1254
    %1764 = vmatpush.bf16.msra.mxu0 %v1250
    %1765 = vmatpush.bf16.msra.mxu0 %v1246
    %1766 = vmatmul.bf16.gmra.mxu0 %v204
    %v1767 = vpop.f32.mrf.mxu0
    %v1768 = vadd.f32 %v470, %v1767
    %v1769 = vpop.f32.mrf.mxu0
    %v1770 = vadd.f32 %v470, %v1769
    %1771 = vdwg.mxu0
    %1772 = vmatpush.bf16.msra.mxu0 %v1306
    %1773 = vmatpush.bf16.msra.mxu0 %v1302
    %1774 = vmatpush.bf16.msra.mxu0 %v1298
    %1775 = vmatpush.bf16.msra.mxu0 %v1294
    %1776 = vmatpush.bf16.msra.mxu0 %v1290
    %1777 = vmatpush.bf16.msra.mxu0 %v1286
    %1778 = vmatpush.bf16.msra.mxu0 %v1282
    %1779 = vmatpush.bf16.msra.mxu0 %v1278
    %1780 = vmatmul.bf16.gmra.mxu0 %v205
    %v1781 = vpop.f32.mrf.mxu0
    %v1782 = vadd.f32 %v1768, %v1781
    %v1783 = vpop.f32.mrf.mxu0
    %v1784 = vadd.f32 %v1770, %v1783
    %1785 = vdwg.mxu0
    %1786 = vmatpush.bf16.msra.mxu0 %v1338
    %1787 = vmatpush.bf16.msra.mxu0 %v1334
    %1788 = vmatpush.bf16.msra.mxu0 %v1330
    %1789 = vmatpush.bf16.msra.mxu0 %v1326
    %1790 = vmatpush.bf16.msra.mxu0 %v1322
    %1791 = vmatpush.bf16.msra.mxu0 %v1318
    %1792 = vmatpush.bf16.msra.mxu0 %v1314
    %1793 = vmatpush.bf16.msra.mxu0 %v1310
    %1794 = vmatmul.bf16.gmra.mxu0 %v206
    %v1795 = vpop.f32.mrf.mxu0
    %v1796 = vadd.f32 %v1782, %v1795
    %v1797 = vpop.f32.mrf.mxu0
    %v1798 = vadd.f32 %v1784, %v1797
    %1799 = vdwg.mxu0
    %1800 = vmatpush.bf16.msra.mxu0 %v1370
    %1801 = vmatpush.bf16.msra.mxu0 %v1366
    %1802 = vmatpush.bf16.msra.mxu0 %v1362
    %1803 = vmatpush.bf16.msra.mxu0 %v1358
    %1804 = vmatpush.bf16.msra.mxu0 %v1354
    %1805 = vmatpush.bf16.msra.mxu0 %v1350
    %1806 = vmatpush.bf16.msra.mxu0 %v1346
    %1807 = vmatpush.bf16.msra.mxu0 %v1342
    %1808 = vmatmul.bf16.gmra.mxu0 %v207
    %v1809 = vpop.f32.mrf.mxu0
    %v1810 = vadd.f32 %v1796, %v1809
    %v1811 = vpop.f32.mrf.mxu0
    %v1812 = vadd.f32 %v1798, %v1811
    %1813 = vdwg.mxu0
    %1814 = vmatpush.bf16.msra.mxu0 %v1402
    %1815 = vmatpush.bf16.msra.mxu0 %v1398
    %1816 = vmatpush.bf16.msra.mxu0 %v1394
    %1817 = vmatpush.bf16.msra.mxu0 %v1390
    %1818 = vmatpush.bf16.msra.mxu0 %v1386
    %1819 = vmatpush.bf16.msra.mxu0 %v1382
    %1820 = vmatpush.bf16.msra.mxu0 %v1378
    %1821 = vmatpush.bf16.msra.mxu0 %v1374
    %1822 = vmatmul.bf16.gmra.mxu0 %v208
    %v1823 = vpop.f32.mrf.mxu0
    %v1824 = vadd.f32 %v1810, %v1823
    %v1825 = vpop.f32.mrf.mxu0
    %v1826 = vadd.f32 %v1812, %v1825
    %1827 = vdwg.mxu0
    %1828 = vmatpush.bf16.msra.mxu0 %v1434
    %1829 = vmatpush.bf16.msra.mxu0 %v1430
    %1830 = vmatpush.bf16.msra.mxu0 %v1426
    %1831 = vmatpush.bf16.msra.mxu0 %v1422
    %1832 = vmatpush.bf16.msra.mxu0 %v1418
    %1833 = vmatpush.bf16.msra.mxu0 %v1414
    %1834 = vmatpush.bf16.msra.mxu0 %v1410
    %1835 = vmatpush.bf16.msra.mxu0 %v1406
    %1836 = vmatmul.bf16.gmra.mxu0 %v209
    %v1837 = vpop.f32.mrf.mxu0
    %v1838 = vadd.f32 %v1824, %v1837
    %v1839 = vpop.f32.mrf.mxu0
    %v1840 = vadd.f32 %v1826, %v1839
    %1841 = vdwg.mxu0
    %1842 = vmatpush.bf16.msra.mxu0 %v1466
    %1843 = vmatpush.bf16.msra.mxu0 %v1462
    %1844 = vmatpush.bf16.msra.mxu0 %v1458
    %1845 = vmatpush.bf16.msra.mxu0 %v1454
    %1846 = vmatpush.bf16.msra.mxu0 %v1450
    %1847 = vmatpush.bf16.msra.mxu0 %v1446
    %1848 = vmatpush.bf16.msra.mxu0 %v1442
    %1849 = vmatpush.bf16.msra.mxu0 %v1438
    %1850 = vmatmul.bf16.gmra.mxu0 %v210
    %v1851 = vpop.f32.mrf.mxu0
    %v1852 = vadd.f32 %v1838, %v1851
    %v1853 = vpop.f32.mrf.mxu0
    %v1854 = vadd.f32 %v1840, %v1853
    %1855 = vdwg.mxu0
    %1856 = vmatpush.bf16.msra.mxu0 %v1498
    %1857 = vmatpush.bf16.msra.mxu0 %v1494
    %1858 = vmatpush.bf16.msra.mxu0 %v1490
    %1859 = vmatpush.bf16.msra.mxu0 %v1486
    %1860 = vmatpush.bf16.msra.mxu0 %v1482
    %1861 = vmatpush.bf16.msra.mxu0 %v1478
    %1862 = vmatpush.bf16.msra.mxu0 %v1474
    %1863 = vmatpush.bf16.msra.mxu0 %v1470
    %1864 = vmatmul.bf16.gmra.mxu0 %v211
    %v1865 = vpop.f32.mrf.mxu0
    %v1866 = vadd.f32 %v1852, %v1865
    %v1867 = vpop.f32.mrf.mxu0
    %v1868 = vadd.f32 %v1854, %v1867
    %1869 = vdwg.mxu0
    %1870 = vmatpush.bf16.msra.mxu0 %v1275
    %1871 = vmatpush.bf16.msra.mxu0 %v1271
    %1872 = vmatpush.bf16.msra.mxu0 %v1267
    %1873 = vmatpush.bf16.msra.mxu0 %v1263
    %1874 = vmatpush.bf16.msra.mxu0 %v1259
    %1875 = vmatpush.bf16.msra.mxu0 %v1255
    %1876 = vmatpush.bf16.msra.mxu0 %v1251
    %1877 = vmatpush.bf16.msra.mxu0 %v1247
    %1878 = vmatmul.bf16.gmra.mxu0 %v204
    %v1879 = vpop.f32.mrf.mxu0
    %v1880 = vadd.f32 %v471, %v1879
    %v1881 = vpop.f32.mrf.mxu0
    %v1882 = vadd.f32 %v471, %v1881
    %1883 = vdwg.mxu0
    %1884 = vmatpush.bf16.msra.mxu0 %v1307
    %1885 = vmatpush.bf16.msra.mxu0 %v1303
    %1886 = vmatpush.bf16.msra.mxu0 %v1299
    %1887 = vmatpush.bf16.msra.mxu0 %v1295
    %1888 = vmatpush.bf16.msra.mxu0 %v1291
    %1889 = vmatpush.bf16.msra.mxu0 %v1287
    %1890 = vmatpush.bf16.msra.mxu0 %v1283
    %1891 = vmatpush.bf16.msra.mxu0 %v1279
    %1892 = vmatmul.bf16.gmra.mxu0 %v205
    %v1893 = vpop.f32.mrf.mxu0
    %v1894 = vadd.f32 %v1880, %v1893
    %v1895 = vpop.f32.mrf.mxu0
    %v1896 = vadd.f32 %v1882, %v1895
    %1897 = vdwg.mxu0
    %1898 = vmatpush.bf16.msra.mxu0 %v1339
    %1899 = vmatpush.bf16.msra.mxu0 %v1335
    %1900 = vmatpush.bf16.msra.mxu0 %v1331
    %1901 = vmatpush.bf16.msra.mxu0 %v1327
    %1902 = vmatpush.bf16.msra.mxu0 %v1323
    %1903 = vmatpush.bf16.msra.mxu0 %v1319
    %1904 = vmatpush.bf16.msra.mxu0 %v1315
    %1905 = vmatpush.bf16.msra.mxu0 %v1311
    %1906 = vmatmul.bf16.gmra.mxu0 %v206
    %v1907 = vpop.f32.mrf.mxu0
    %v1908 = vadd.f32 %v1894, %v1907
    %v1909 = vpop.f32.mrf.mxu0
    %v1910 = vadd.f32 %v1896, %v1909
    %1911 = vdwg.mxu0
    %1912 = vmatpush.bf16.msra.mxu0 %v1371
    %1913 = vmatpush.bf16.msra.mxu0 %v1367
    %1914 = vmatpush.bf16.msra.mxu0 %v1363
    %1915 = vmatpush.bf16.msra.mxu0 %v1359
    %1916 = vmatpush.bf16.msra.mxu0 %v1355
    %1917 = vmatpush.bf16.msra.mxu0 %v1351
    %1918 = vmatpush.bf16.msra.mxu0 %v1347
    %1919 = vmatpush.bf16.msra.mxu0 %v1343
    %1920 = vmatmul.bf16.gmra.mxu0 %v207
    %v1921 = vpop.f32.mrf.mxu0
    %v1922 = vadd.f32 %v1908, %v1921
    %v1923 = vpop.f32.mrf.mxu0
    %v1924 = vadd.f32 %v1910, %v1923
    %1925 = vdwg.mxu0
    %1926 = vmatpush.bf16.msra.mxu0 %v1403
    %1927 = vmatpush.bf16.msra.mxu0 %v1399
    %1928 = vmatpush.bf16.msra.mxu0 %v1395
    %1929 = vmatpush.bf16.msra.mxu0 %v1391
    %1930 = vmatpush.bf16.msra.mxu0 %v1387
    %1931 = vmatpush.bf16.msra.mxu0 %v1383
    %1932 = vmatpush.bf16.msra.mxu0 %v1379
    %1933 = vmatpush.bf16.msra.mxu0 %v1375
    %1934 = vmatmul.bf16.gmra.mxu0 %v208
    %v1935 = vpop.f32.mrf.mxu0
    %v1936 = vadd.f32 %v1922, %v1935
    %v1937 = vpop.f32.mrf.mxu0
    %v1938 = vadd.f32 %v1924, %v1937
    %1939 = vdwg.mxu0
    %1940 = vmatpush.bf16.msra.mxu0 %v1435
    %1941 = vmatpush.bf16.msra.mxu0 %v1431
    %1942 = vmatpush.bf16.msra.mxu0 %v1427
    %1943 = vmatpush.bf16.msra.mxu0 %v1423
    %1944 = vmatpush.bf16.msra.mxu0 %v1419
    %1945 = vmatpush.bf16.msra.mxu0 %v1415
    %1946 = vmatpush.bf16.msra.mxu0 %v1411
    %1947 = vmatpush.bf16.msra.mxu0 %v1407
    %1948 = vmatmul.bf16.gmra.mxu0 %v209
    %v1949 = vpop.f32.mrf.mxu0
    %v1950 = vadd.f32 %v1936, %v1949
    %v1951 = vpop.f32.mrf.mxu0
    %v1952 = vadd.f32 %v1938, %v1951
    %1953 = vdwg.mxu0
    %1954 = vmatpush.bf16.msra.mxu0 %v1467
    %1955 = vmatpush.bf16.msra.mxu0 %v1463
    %1956 = vmatpush.bf16.msra.mxu0 %v1459
    %1957 = vmatpush.bf16.msra.mxu0 %v1455
    %1958 = vmatpush.bf16.msra.mxu0 %v1451
    %1959 = vmatpush.bf16.msra.mxu0 %v1447
    %1960 = vmatpush.bf16.msra.mxu0 %v1443
    %1961 = vmatpush.bf16.msra.mxu0 %v1439
    %1962 = vmatmul.bf16.gmra.mxu0 %v210
    %v1963 = vpop.f32.mrf.mxu0
    %v1964 = vadd.f32 %v1950, %v1963
    %v1965 = vpop.f32.mrf.mxu0
    %v1966 = vadd.f32 %v1952, %v1965
    %1967 = vdwg.mxu0
    %1968 = vmatpush.bf16.msra.mxu0 %v1499
    %1969 = vmatpush.bf16.msra.mxu0 %v1495
    %1970 = vmatpush.bf16.msra.mxu0 %v1491
    %1971 = vmatpush.bf16.msra.mxu0 %v1487
    %1972 = vmatpush.bf16.msra.mxu0 %v1483
    %1973 = vmatpush.bf16.msra.mxu0 %v1479
    %1974 = vmatpush.bf16.msra.mxu0 %v1475
    %1975 = vmatpush.bf16.msra.mxu0 %v1471
    %1976 = vmatmul.bf16.gmra.mxu0 %v211
    %v1977 = vpop.f32.mrf.mxu0
    %v1978 = vadd.f32 %v1964, %v1977
    %v1979 = vpop.f32.mrf.mxu0
    %v1980 = vadd.f32 %v1966, %v1979
    %1981 = vdwg.mxu0
    %1982 = vmatpush.bf16.msra.mxu0 %v1276
    %1983 = vmatpush.bf16.msra.mxu0 %v1272
    %1984 = vmatpush.bf16.msra.mxu0 %v1268
    %1985 = vmatpush.bf16.msra.mxu0 %v1264
    %1986 = vmatpush.bf16.msra.mxu0 %v1260
    %1987 = vmatpush.bf16.msra.mxu0 %v1256
    %1988 = vmatpush.bf16.msra.mxu0 %v1252
    %1989 = vmatpush.bf16.msra.mxu0 %v1248
    %1990 = vmatmul.bf16.gmra.mxu0 %v204
    %v1991 = vpop.f32.mrf.mxu0
    %v1992 = vadd.f32 %v472, %v1991
    %v1993 = vpop.f32.mrf.mxu0
    %v1994 = vadd.f32 %v472, %v1993
    %1995 = vdwg.mxu0
    %1996 = vmatpush.bf16.msra.mxu0 %v1308
    %1997 = vmatpush.bf16.msra.mxu0 %v1304
    %1998 = vmatpush.bf16.msra.mxu0 %v1300
    %1999 = vmatpush.bf16.msra.mxu0 %v1296
    %2000 = vmatpush.bf16.msra.mxu0 %v1292
    %2001 = vmatpush.bf16.msra.mxu0 %v1288
    %2002 = vmatpush.bf16.msra.mxu0 %v1284
    %2003 = vmatpush.bf16.msra.mxu0 %v1280
    %2004 = vmatmul.bf16.gmra.mxu0 %v205
    %v2005 = vpop.f32.mrf.mxu0
    %v2006 = vadd.f32 %v1992, %v2005
    %v2007 = vpop.f32.mrf.mxu0
    %v2008 = vadd.f32 %v1994, %v2007
    %2009 = vdwg.mxu0
    %2010 = vmatpush.bf16.msra.mxu0 %v1340
    %2011 = vmatpush.bf16.msra.mxu0 %v1336
    %2012 = vmatpush.bf16.msra.mxu0 %v1332
    %2013 = vmatpush.bf16.msra.mxu0 %v1328
    %2014 = vmatpush.bf16.msra.mxu0 %v1324
    %2015 = vmatpush.bf16.msra.mxu0 %v1320
    %2016 = vmatpush.bf16.msra.mxu0 %v1316
    %2017 = vmatpush.bf16.msra.mxu0 %v1312
    %2018 = vmatmul.bf16.gmra.mxu0 %v206
    %v2019 = vpop.f32.mrf.mxu0
    %v2020 = vadd.f32 %v2006, %v2019
    %v2021 = vpop.f32.mrf.mxu0
    %v2022 = vadd.f32 %v2008, %v2021
    %2023 = vdwg.mxu0
    %2024 = vmatpush.bf16.msra.mxu0 %v1372
    %2025 = vmatpush.bf16.msra.mxu0 %v1368
    %2026 = vmatpush.bf16.msra.mxu0 %v1364
    %2027 = vmatpush.bf16.msra.mxu0 %v1360
    %2028 = vmatpush.bf16.msra.mxu0 %v1356
    %2029 = vmatpush.bf16.msra.mxu0 %v1352
    %2030 = vmatpush.bf16.msra.mxu0 %v1348
    %2031 = vmatpush.bf16.msra.mxu0 %v1344
    %2032 = vmatmul.bf16.gmra.mxu0 %v207
    %v2033 = vpop.f32.mrf.mxu0
    %v2034 = vadd.f32 %v2020, %v2033
    %v2035 = vpop.f32.mrf.mxu0
    %v2036 = vadd.f32 %v2022, %v2035
    %2037 = vdwg.mxu0
    %2038 = vmatpush.bf16.msra.mxu0 %v1404
    %2039 = vmatpush.bf16.msra.mxu0 %v1400
    %2040 = vmatpush.bf16.msra.mxu0 %v1396
    %2041 = vmatpush.bf16.msra.mxu0 %v1392
    %2042 = vmatpush.bf16.msra.mxu0 %v1388
    %2043 = vmatpush.bf16.msra.mxu0 %v1384
    %2044 = vmatpush.bf16.msra.mxu0 %v1380
    %2045 = vmatpush.bf16.msra.mxu0 %v1376
    %2046 = vmatmul.bf16.gmra.mxu0 %v208
    %v2047 = vpop.f32.mrf.mxu0
    %v2048 = vadd.f32 %v2034, %v2047
    %v2049 = vpop.f32.mrf.mxu0
    %v2050 = vadd.f32 %v2036, %v2049
    %2051 = vdwg.mxu0
    %2052 = vmatpush.bf16.msra.mxu0 %v1436
    %2053 = vmatpush.bf16.msra.mxu0 %v1432
    %2054 = vmatpush.bf16.msra.mxu0 %v1428
    %2055 = vmatpush.bf16.msra.mxu0 %v1424
    %2056 = vmatpush.bf16.msra.mxu0 %v1420
    %2057 = vmatpush.bf16.msra.mxu0 %v1416
    %2058 = vmatpush.bf16.msra.mxu0 %v1412
    %2059 = vmatpush.bf16.msra.mxu0 %v1408
    %2060 = vmatmul.bf16.gmra.mxu0 %v209
    %v2061 = vpop.f32.mrf.mxu0
    %v2062 = vadd.f32 %v2048, %v2061
    %v2063 = vpop.f32.mrf.mxu0
    %v2064 = vadd.f32 %v2050, %v2063
    %2065 = vdwg.mxu0
    %2066 = vmatpush.bf16.msra.mxu0 %v1468
    %2067 = vmatpush.bf16.msra.mxu0 %v1464
    %2068 = vmatpush.bf16.msra.mxu0 %v1460
    %2069 = vmatpush.bf16.msra.mxu0 %v1456
    %2070 = vmatpush.bf16.msra.mxu0 %v1452
    %2071 = vmatpush.bf16.msra.mxu0 %v1448
    %2072 = vmatpush.bf16.msra.mxu0 %v1444
    %2073 = vmatpush.bf16.msra.mxu0 %v1440
    %2074 = vmatmul.bf16.gmra.mxu0 %v210
    %v2075 = vpop.f32.mrf.mxu0
    %v2076 = vadd.f32 %v2062, %v2075
    %v2077 = vpop.f32.mrf.mxu0
    %v2078 = vadd.f32 %v2064, %v2077
    %2079 = vdwg.mxu0
    %2080 = vmatpush.bf16.msra.mxu0 %v1500
    %2081 = vmatpush.bf16.msra.mxu0 %v1496
    %2082 = vmatpush.bf16.msra.mxu0 %v1492
    %2083 = vmatpush.bf16.msra.mxu0 %v1488
    %2084 = vmatpush.bf16.msra.mxu0 %v1484
    %2085 = vmatpush.bf16.msra.mxu0 %v1480
    %2086 = vmatpush.bf16.msra.mxu0 %v1476
    %2087 = vmatpush.bf16.msra.mxu0 %v1472
    %2088 = vmatmul.bf16.gmra.mxu0 %v211
    %v2089 = vpop.f32.mrf.mxu0
    %v2090 = vadd.f32 %v2076, %v2089
    %v2091 = vpop.f32.mrf.mxu0
    %v2092 = vadd.f32 %v2078, %v2091
    %2093 = vdwg.mxu0
    %2094 = vmatpush.bf16.msra.mxu0 %v1277
    %2095 = vmatpush.bf16.msra.mxu0 %v1273
    %2096 = vmatpush.bf16.msra.mxu0 %v1269
    %2097 = vmatpush.bf16.msra.mxu0 %v1265
    %2098 = vmatpush.bf16.msra.mxu0 %v1261
    %2099 = vmatpush.bf16.msra.mxu0 %v1257
    %2100 = vmatpush.bf16.msra.mxu0 %v1253
    %2101 = vmatpush.bf16.msra.mxu0 %v1249
    %2102 = vmatmul.bf16.gmra.mxu0 %v204
    %v2103 = vpop.f32.mrf.mxu0
    %v2104 = vadd.f32 %v473, %v2103
    %v2105 = vpop.f32.mrf.mxu0
    %v2106 = vadd.f32 %v473, %v2105
    %2107 = vdwg.mxu0
    %2108 = vmatpush.bf16.msra.mxu0 %v1309
    %2109 = vmatpush.bf16.msra.mxu0 %v1305
    %2110 = vmatpush.bf16.msra.mxu0 %v1301
    %2111 = vmatpush.bf16.msra.mxu0 %v1297
    %2112 = vmatpush.bf16.msra.mxu0 %v1293
    %2113 = vmatpush.bf16.msra.mxu0 %v1289
    %2114 = vmatpush.bf16.msra.mxu0 %v1285
    %2115 = vmatpush.bf16.msra.mxu0 %v1281
    %2116 = vmatmul.bf16.gmra.mxu0 %v205
    %v2117 = vpop.f32.mrf.mxu0
    %v2118 = vadd.f32 %v2104, %v2117
    %v2119 = vpop.f32.mrf.mxu0
    %v2120 = vadd.f32 %v2106, %v2119
    %2121 = vdwg.mxu0
    %2122 = vmatpush.bf16.msra.mxu0 %v1341
    %2123 = vmatpush.bf16.msra.mxu0 %v1337
    %2124 = vmatpush.bf16.msra.mxu0 %v1333
    %2125 = vmatpush.bf16.msra.mxu0 %v1329
    %2126 = vmatpush.bf16.msra.mxu0 %v1325
    %2127 = vmatpush.bf16.msra.mxu0 %v1321
    %2128 = vmatpush.bf16.msra.mxu0 %v1317
    %2129 = vmatpush.bf16.msra.mxu0 %v1313
    %2130 = vmatmul.bf16.gmra.mxu0 %v206
    %v2131 = vpop.f32.mrf.mxu0
    %v2132 = vadd.f32 %v2118, %v2131
    %v2133 = vpop.f32.mrf.mxu0
    %v2134 = vadd.f32 %v2120, %v2133
    %2135 = vdwg.mxu0
    %2136 = vmatpush.bf16.msra.mxu0 %v1373
    %2137 = vmatpush.bf16.msra.mxu0 %v1369
    %2138 = vmatpush.bf16.msra.mxu0 %v1365
    %2139 = vmatpush.bf16.msra.mxu0 %v1361
    %2140 = vmatpush.bf16.msra.mxu0 %v1357
    %2141 = vmatpush.bf16.msra.mxu0 %v1353
    %2142 = vmatpush.bf16.msra.mxu0 %v1349
    %2143 = vmatpush.bf16.msra.mxu0 %v1345
    %2144 = vmatmul.bf16.gmra.mxu0 %v207
    %v2145 = vpop.f32.mrf.mxu0
    %v2146 = vadd.f32 %v2132, %v2145
    %v2147 = vpop.f32.mrf.mxu0
    %v2148 = vadd.f32 %v2134, %v2147
    %2149 = vdwg.mxu0
    %2150 = vmatpush.bf16.msra.mxu0 %v1405
    %2151 = vmatpush.bf16.msra.mxu0 %v1401
    %2152 = vmatpush.bf16.msra.mxu0 %v1397
    %2153 = vmatpush.bf16.msra.mxu0 %v1393
    %2154 = vmatpush.bf16.msra.mxu0 %v1389
    %2155 = vmatpush.bf16.msra.mxu0 %v1385
    %2156 = vmatpush.bf16.msra.mxu0 %v1381
    %2157 = vmatpush.bf16.msra.mxu0 %v1377
    %2158 = vmatmul.bf16.gmra.mxu0 %v208
    %v2159 = vpop.f32.mrf.mxu0
    %v2160 = vadd.f32 %v2146, %v2159
    %v2161 = vpop.f32.mrf.mxu0
    %v2162 = vadd.f32 %v2148, %v2161
    %2163 = vdwg.mxu0
    %2164 = vmatpush.bf16.msra.mxu0 %v1437
    %2165 = vmatpush.bf16.msra.mxu0 %v1433
    %2166 = vmatpush.bf16.msra.mxu0 %v1429
    %2167 = vmatpush.bf16.msra.mxu0 %v1425
    %2168 = vmatpush.bf16.msra.mxu0 %v1421
    %2169 = vmatpush.bf16.msra.mxu0 %v1417
    %2170 = vmatpush.bf16.msra.mxu0 %v1413
    %2171 = vmatpush.bf16.msra.mxu0 %v1409
    %2172 = vmatmul.bf16.gmra.mxu0 %v209
    %v2173 = vpop.f32.mrf.mxu0
    %v2174 = vadd.f32 %v2160, %v2173
    %v2175 = vpop.f32.mrf.mxu0
    %v2176 = vadd.f32 %v2162, %v2175
    %2177 = vdwg.mxu0
    %2178 = vmatpush.bf16.msra.mxu0 %v1469
    %2179 = vmatpush.bf16.msra.mxu0 %v1465
    %2180 = vmatpush.bf16.msra.mxu0 %v1461
    %2181 = vmatpush.bf16.msra.mxu0 %v1457
    %2182 = vmatpush.bf16.msra.mxu0 %v1453
    %2183 = vmatpush.bf16.msra.mxu0 %v1449
    %2184 = vmatpush.bf16.msra.mxu0 %v1445
    %2185 = vmatpush.bf16.msra.mxu0 %v1441
    %2186 = vmatmul.bf16.gmra.mxu0 %v210
    %v2187 = vpop.f32.mrf.mxu0
    %v2188 = vadd.f32 %v2174, %v2187
    %v2189 = vpop.f32.mrf.mxu0
    %v2190 = vadd.f32 %v2176, %v2189
    %2191 = vdwg.mxu0
    %2192 = vmatpush.bf16.msra.mxu0 %v1501
    %2193 = vmatpush.bf16.msra.mxu0 %v1497
    %2194 = vmatpush.bf16.msra.mxu0 %v1493
    %2195 = vmatpush.bf16.msra.mxu0 %v1489
    %2196 = vmatpush.bf16.msra.mxu0 %v1485
    %2197 = vmatpush.bf16.msra.mxu0 %v1481
    %2198 = vmatpush.bf16.msra.mxu0 %v1477
    %2199 = vmatpush.bf16.msra.mxu0 %v1473
    %2200 = vmatmul.bf16.gmra.mxu0 %v211
    %v2201 = vpop.f32.mrf.mxu0
    %v2202 = vadd.f32 %v2188, %v2201
    %v2203 = vpop.f32.mrf.mxu0
    %v2204 = vadd.f32 %v2190, %v2203
    %2205 = vdwg.mxu0
    %v2206 = vmax.f32 %v1866, 0.0
    %v2207 = vmax.f32 %v1978, 0.0
    %v2208 = vmax.f32 %v2090, 0.0
    %v2209 = vmax.f32 %v2202, 0.0
    %v2210 = vmax.f32 %v1868, 0.0
    %v2211 = vmax.f32 %v1980, 0.0
    %v2212 = vmax.f32 %v2092, 0.0
    %v2213 = vmax.f32 %v2204, 0.0
    %v2214 = vpack.c.bf16 %v2210, %v2206
    %v2215 = vpack.c.bf16 %v2211, %v2207
    %v2216 = vpack.c.bf16 %v2212, %v2208
    %v2217 = vpack.c.bf16 %v2213, %v2209
    %v2218 = vld [vmem:[#allocation8] sm:$0xff]
    %v2219 = vld [vmem:[#allocation8 + $0x8] sm:$0xff]
    %v2220 = vld [vmem:[#allocation8 + $0x10] sm:$0xff]
    %v2221 = vld [vmem:[#allocation8 + $0x18] sm:$0xff]
    %v2222 = vld [vmem:[#allocation8 + $0x20] sm:$0xff]
    %v2223 = vld [vmem:[#allocation8 + $0x28] sm:$0xff]
    %v2224 = vld [vmem:[#allocation8 + $0x30] sm:$0xff]
    %v2225 = vld [vmem:[#allocation8 + $0x38] sm:$0xff]
    %v2226 = vld [vmem:[#allocation8 + $0x40] sm:$0xff]
    %v2227 = vld [vmem:[#allocation8 + $0x48] sm:$0xff]
    %v2228 = vld [vmem:[#allocation8 + $0x50] sm:$0xff]
    %v2229 = vld [vmem:[#allocation8 + $0x58] sm:$0xff]
    %v2230 = vld [vmem:[#allocation8 + $0x60] sm:$0xff]
    %v2231 = vld [vmem:[#allocation8 + $0x68] sm:$0xff]
    %v2232 = vld [vmem:[#allocation8 + $0x70] sm:$0xff]
    %v2233 = vld [vmem:[#allocation8 + $0x78] sm:$0xff]
    %v2234 = vld [vmem:[#allocation8 + $0x80] sm:$0xff]
    %v2235 = vld [vmem:[#allocation8 + $0x88] sm:$0xff]
    %v2236 = vld [vmem:[#allocation8 + $0x90] sm:$0xff]
    %v2237 = vld [vmem:[#allocation8 + $0x98] sm:$0xff]
    %v2238 = vld [vmem:[#allocation8 + $0xa0] sm:$0xff]
    %v2239 = vld [vmem:[#allocation8 + $0xa8] sm:$0xff]
    %v2240 = vld [vmem:[#allocation8 + $0xb0] sm:$0xff]
    %v2241 = vld [vmem:[#allocation8 + $0xb8] sm:$0xff]
    %v2242 = vld [vmem:[#allocation8 + $0xc0] sm:$0xff]
    %v2243 = vld [vmem:[#allocation8 + $0xc8] sm:$0xff]
    %v2244 = vld [vmem:[#allocation8 + $0xd0] sm:$0xff]
    %v2245 = vld [vmem:[#allocation8 + $0xd8] sm:$0xff]
    %v2246 = vld [vmem:[#allocation8 + $0xe0] sm:$0xff]
    %v2247 = vld [vmem:[#allocation8 + $0xe8] sm:$0xff]
    %v2248 = vld [vmem:[#allocation8 + $0xf0] sm:$0xff]
    %v2249 = vld [vmem:[#allocation8 + $0xf8] sm:$0xff]
    %v2250 = vld [vmem:[#allocation8 + $0x100] sm:$0xff]
    %v2251 = vld [vmem:[#allocation8 + $0x108] sm:$0xff]
    %v2252 = vld [vmem:[#allocation8 + $0x110] sm:$0xff]
    %v2253 = vld [vmem:[#allocation8 + $0x118] sm:$0xff]
    %v2254 = vld [vmem:[#allocation8 + $0x120] sm:$0xff]
    %v2255 = vld [vmem:[#allocation8 + $0x128] sm:$0xff]
    %v2256 = vld [vmem:[#allocation8 + $0x130] sm:$0xff]
    %v2257 = vld [vmem:[#allocation8 + $0x138] sm:$0xff]
    %v2258 = vld [vmem:[#allocation8 + $0x140] sm:$0xff]
    %v2259 = vld [vmem:[#allocation8 + $0x148] sm:$0xff]
    %v2260 = vld [vmem:[#allocation8 + $0x150] sm:$0xff]
    %v2261 = vld [vmem:[#allocation8 + $0x158] sm:$0xff]
    %v2262 = vld [vmem:[#allocation8 + $0x160] sm:$0xff]
    %v2263 = vld [vmem:[#allocation8 + $0x168] sm:$0xff]
    %v2264 = vld [vmem:[#allocation8 + $0x170] sm:$0xff]
    %v2265 = vld [vmem:[#allocation8 + $0x178] sm:$0xff]
    %v2266 = vld [vmem:[#allocation8 + $0x180] sm:$0xff]
    %v2267 = vld [vmem:[#allocation8 + $0x188] sm:$0xff]
    %v2268 = vld [vmem:[#allocation8 + $0x190] sm:$0xff]
    %v2269 = vld [vmem:[#allocation8 + $0x198] sm:$0xff]
    %v2270 = vld [vmem:[#allocation8 + $0x1a0] sm:$0xff]
    %v2271 = vld [vmem:[#allocation8 + $0x1a8] sm:$0xff]
    %v2272 = vld [vmem:[#allocation8 + $0x1b0] sm:$0xff]
    %v2273 = vld [vmem:[#allocation8 + $0x1b8] sm:$0xff]
    %v2274 = vld [vmem:[#allocation8 + $0x1c0] sm:$0xff]
    %v2275 = vld [vmem:[#allocation8 + $0x1c8] sm:$0xff]
    %v2276 = vld [vmem:[#allocation8 + $0x1d0] sm:$0xff]
    %v2277 = vld [vmem:[#allocation8 + $0x1d8] sm:$0xff]
    %v2278 = vld [vmem:[#allocation8 + $0x1e0] sm:$0xff]
    %v2279 = vld [vmem:[#allocation8 + $0x1e8] sm:$0xff]
    %v2280 = vld [vmem:[#allocation8 + $0x1f0] sm:$0xff]
    %v2281 = vld [vmem:[#allocation8 + $0x1f8] sm:$0xff]
    %v2282 = vld [vmem:[#allocation8 + $0x200] sm:$0xff]
    %v2283 = vld [vmem:[#allocation8 + $0x208] sm:$0xff]
    %v2284 = vld [vmem:[#allocation8 + $0x210] sm:$0xff]
    %v2285 = vld [vmem:[#allocation8 + $0x218] sm:$0xff]
    %v2286 = vld [vmem:[#allocation8 + $0x220] sm:$0xff]
    %v2287 = vld [vmem:[#allocation8 + $0x228] sm:$0xff]
    %v2288 = vld [vmem:[#allocation8 + $0x230] sm:$0xff]
    %v2289 = vld [vmem:[#allocation8 + $0x238] sm:$0xff]
    %v2290 = vld [vmem:[#allocation8 + $0x240] sm:$0xff]
    %v2291 = vld [vmem:[#allocation8 + $0x248] sm:$0xff]
    %v2292 = vld [vmem:[#allocation8 + $0x250] sm:$0xff]
    %v2293 = vld [vmem:[#allocation8 + $0x258] sm:$0xff]
    %v2294 = vld [vmem:[#allocation8 + $0x260] sm:$0xff]
    %v2295 = vld [vmem:[#allocation8 + $0x268] sm:$0xff]
    %v2296 = vld [vmem:[#allocation8 + $0x270] sm:$0xff]
    %v2297 = vld [vmem:[#allocation8 + $0x278] sm:$0xff]
    %v2298 = vld [vmem:[#allocation8 + $0x280] sm:$0xff]
    %v2299 = vld [vmem:[#allocation8 + $0x288] sm:$0xff]
    %v2300 = vld [vmem:[#allocation8 + $0x290] sm:$0xff]
    %v2301 = vld [vmem:[#allocation8 + $0x298] sm:$0xff]
    %v2302 = vld [vmem:[#allocation8 + $0x2a0] sm:$0xff]
    %v2303 = vld [vmem:[#allocation8 + $0x2a8] sm:$0xff]
    %v2304 = vld [vmem:[#allocation8 + $0x2b0] sm:$0xff]
    %v2305 = vld [vmem:[#allocation8 + $0x2b8] sm:$0xff]
    %v2306 = vld [vmem:[#allocation8 + $0x2c0] sm:$0xff]
    %v2307 = vld [vmem:[#allocation8 + $0x2c8] sm:$0xff]
    %v2308 = vld [vmem:[#allocation8 + $0x2d0] sm:$0xff]
    %v2309 = vld [vmem:[#allocation8 + $0x2d8] sm:$0xff]
    %v2310 = vld [vmem:[#allocation8 + $0x2e0] sm:$0xff]
    %v2311 = vld [vmem:[#allocation8 + $0x2e8] sm:$0xff]
    %v2312 = vld [vmem:[#allocation8 + $0x2f0] sm:$0xff]
    %v2313 = vld [vmem:[#allocation8 + $0x2f8] sm:$0xff]
    %v2314 = vld [vmem:[#allocation8 + $0x300] sm:$0xff]
    %v2315 = vld [vmem:[#allocation8 + $0x308] sm:$0xff]
    %v2316 = vld [vmem:[#allocation8 + $0x310] sm:$0xff]
    %v2317 = vld [vmem:[#allocation8 + $0x318] sm:$0xff]
    %v2318 = vld [vmem:[#allocation8 + $0x320] sm:$0xff]
    %v2319 = vld [vmem:[#allocation8 + $0x328] sm:$0xff]
    %v2320 = vld [vmem:[#allocation8 + $0x330] sm:$0xff]
    %v2321 = vld [vmem:[#allocation8 + $0x338] sm:$0xff]
    %v2322 = vld [vmem:[#allocation8 + $0x340] sm:$0xff]
    %v2323 = vld [vmem:[#allocation8 + $0x348] sm:$0xff]
    %v2324 = vld [vmem:[#allocation8 + $0x350] sm:$0xff]
    %v2325 = vld [vmem:[#allocation8 + $0x358] sm:$0xff]
    %v2326 = vld [vmem:[#allocation8 + $0x360] sm:$0xff]
    %v2327 = vld [vmem:[#allocation8 + $0x368] sm:$0xff]
    %v2328 = vld [vmem:[#allocation8 + $0x370] sm:$0xff]
    %v2329 = vld [vmem:[#allocation8 + $0x378] sm:$0xff]
    %v2330 = vld [vmem:[#allocation8 + $0x380] sm:$0xff]
    %v2331 = vld [vmem:[#allocation8 + $0x388] sm:$0xff]
    %v2332 = vld [vmem:[#allocation8 + $0x390] sm:$0xff]
    %v2333 = vld [vmem:[#allocation8 + $0x398] sm:$0xff]
    %v2334 = vld [vmem:[#allocation8 + $0x3a0] sm:$0xff]
    %v2335 = vld [vmem:[#allocation8 + $0x3a8] sm:$0xff]
    %v2336 = vld [vmem:[#allocation8 + $0x3b0] sm:$0xff]
    %v2337 = vld [vmem:[#allocation8 + $0x3b8] sm:$0xff]
    %v2338 = vld [vmem:[#allocation8 + $0x3c0] sm:$0xff]
    %v2339 = vld [vmem:[#allocation8 + $0x3c8] sm:$0xff]
    %v2340 = vld [vmem:[#allocation8 + $0x3d0] sm:$0xff]
    %v2341 = vld [vmem:[#allocation8 + $0x3d8] sm:$0xff]
    %v2342 = vld [vmem:[#allocation8 + $0x3e0] sm:$0xff]
    %v2343 = vld [vmem:[#allocation8 + $0x3e8] sm:$0xff]
    %v2344 = vld [vmem:[#allocation8 + $0x3f0] sm:$0xff]
    %v2345 = vld [vmem:[#allocation8 + $0x3f8] sm:$0xff]
    %v2346 = vld [vmem:[#allocation10] sm:$0xf]
    %v2348 = vperm.slane %v2346, 0
    %v2349 = vperm.slane %v2346, 1
    %v2350 = vperm.slane %v2346, 2
    %v2351 = vperm.slane %v2346, 3
    %v2484 = vunpack.c.l.b16 %v2218
    %v2485 = vunpack.c.h.b16 %v2218
    %v2486 = vunpack.c.l.b16 %v2219
    %v2487 = vunpack.c.h.b16 %v2219
    %v2488 = vunpack.c.l.b16 %v2220
    %v2489 = vunpack.c.h.b16 %v2220
    %v2490 = vunpack.c.l.b16 %v2221
    %v2491 = vunpack.c.h.b16 %v2221
    %v2492 = vunpack.c.l.b16 %v2222
    %v2493 = vunpack.c.h.b16 %v2222
    %v2494 = vunpack.c.l.b16 %v2223
    %v2495 = vunpack.c.h.b16 %v2223
    %v2496 = vunpack.c.l.b16 %v2224
    %v2497 = vunpack.c.h.b16 %v2224
    %v2498 = vunpack.c.l.b16 %v2225
    %v2499 = vunpack.c.h.b16 %v2225
    %v2500 = vunpack.c.l.b16 %v2226
    %v2501 = vunpack.c.h.b16 %v2226
    %v2502 = vunpack.c.l.b16 %v2227
    %v2503 = vunpack.c.h.b16 %v2227
    %v2504 = vunpack.c.l.b16 %v2228
    %v2505 = vunpack.c.h.b16 %v2228
    %v2506 = vunpack.c.l.b16 %v2229
    %v2507 = vunpack.c.h.b16 %v2229
    %v2508 = vunpack.c.l.b16 %v2230
    %v2509 = vunpack.c.h.b16 %v2230
    %v2510 = vunpack.c.l.b16 %v2231
    %v2511 = vunpack.c.h.b16 %v2231
    %v2512 = vunpack.c.l.b16 %v2232
    %v2513 = vunpack.c.h.b16 %v2232
    %v2514 = vunpack.c.l.b16 %v2233
    %v2515 = vunpack.c.h.b16 %v2233
    %v2516 = vunpack.c.l.b16 %v2234
    %v2517 = vunpack.c.h.b16 %v2234
    %v2518 = vunpack.c.l.b16 %v2235
    %v2519 = vunpack.c.h.b16 %v2235
    %v2520 = vunpack.c.l.b16 %v2236
    %v2521 = vunpack.c.h.b16 %v2236
    %v2522 = vunpack.c.l.b16 %v2237
    %v2523 = vunpack.c.h.b16 %v2237
    %v2524 = vunpack.c.l.b16 %v2238
    %v2525 = vunpack.c.h.b16 %v2238
    %v2526 = vunpack.c.l.b16 %v2239
    %v2527 = vunpack.c.h.b16 %v2239
    %v2528 = vunpack.c.l.b16 %v2240
    %v2529 = vunpack.c.h.b16 %v2240
    %v2530 = vunpack.c.l.b16 %v2241
    %v2531 = vunpack.c.h.b16 %v2241
    %v2532 = vunpack.c.l.b16 %v2242
    %v2533 = vunpack.c.h.b16 %v2242
    %v2534 = vunpack.c.l.b16 %v2243
    %v2535 = vunpack.c.h.b16 %v2243
    %v2536 = vunpack.c.l.b16 %v2244
    %v2537 = vunpack.c.h.b16 %v2244
    %v2538 = vunpack.c.l.b16 %v2245
    %v2539 = vunpack.c.h.b16 %v2245
    %v2540 = vunpack.c.l.b16 %v2246
    %v2541 = vunpack.c.h.b16 %v2246
    %v2542 = vunpack.c.l.b16 %v2247
    %v2543 = vunpack.c.h.b16 %v2247
    %v2544 = vunpack.c.l.b16 %v2248
    %v2545 = vunpack.c.h.b16 %v2248
    %v2546 = vunpack.c.l.b16 %v2249
    %v2547 = vunpack.c.h.b16 %v2249
    %v2548 = vunpack.c.l.b16 %v2250
    %v2549 = vunpack.c.h.b16 %v2250
    %v2550 = vunpack.c.l.b16 %v2251
    %v2551 = vunpack.c.h.b16 %v2251
    %v2552 = vunpack.c.l.b16 %v2252
    %v2553 = vunpack.c.h.b16 %v2252
    %v2554 = vunpack.c.l.b16 %v2253
    %v2555 = vunpack.c.h.b16 %v2253
    %v2556 = vunpack.c.l.b16 %v2254
    %v2557 = vunpack.c.h.b16 %v2254
    %v2558 = vunpack.c.l.b16 %v2255
    %v2559 = vunpack.c.h.b16 %v2255
    %v2560 = vunpack.c.l.b16 %v2256
    %v2561 = vunpack.c.h.b16 %v2256
    %v2562 = vunpack.c.l.b16 %v2257
    %v2563 = vunpack.c.h.b16 %v2257
    %v2564 = vunpack.c.l.b16 %v2258
    %v2565 = vunpack.c.h.b16 %v2258
    %v2566 = vunpack.c.l.b16 %v2259
    %v2567 = vunpack.c.h.b16 %v2259
    %v2568 = vunpack.c.l.b16 %v2260
    %v2569 = vunpack.c.h.b16 %v2260
    %v2570 = vunpack.c.l.b16 %v2261
    %v2571 = vunpack.c.h.b16 %v2261
    %v2572 = vunpack.c.l.b16 %v2262
    %v2573 = vunpack.c.h.b16 %v2262
    %v2574 = vunpack.c.l.b16 %v2263
    %v2575 = vunpack.c.h.b16 %v2263
    %v2576 = vunpack.c.l.b16 %v2264
    %v2577 = vunpack.c.h.b16 %v2264
    %v2578 = vunpack.c.l.b16 %v2265
    %v2579 = vunpack.c.h.b16 %v2265
    %v2580 = vunpack.c.l.b16 %v2266
    %v2581 = vunpack.c.h.b16 %v2266
    %v2582 = vunpack.c.l.b16 %v2267
    %v2583 = vunpack.c.h.b16 %v2267
    %v2584 = vunpack.c.l.b16 %v2268
    %v2585 = vunpack.c.h.b16 %v2268
    %v2586 = vunpack.c.l.b16 %v2269
    %v2587 = vunpack.c.h.b16 %v2269
    %v2588 = vunpack.c.l.b16 %v2270
    %v2589 = vunpack.c.h.b16 %v2270
    %v2590 = vunpack.c.l.b16 %v2271
    %v2591 = vunpack.c.h.b16 %v2271
    %v2592 = vunpack.c.l.b16 %v2272
    %v2593 = vunpack.c.h.b16 %v2272
    %v2594 = vunpack.c.l.b16 %v2273
    %v2595 = vunpack.c.h.b16 %v2273
    %v2596 = vunpack.c.l.b16 %v2274
    %v2597 = vunpack.c.h.b16 %v2274
    %v2598 = vunpack.c.l.b16 %v2275
    %v2599 = vunpack.c.h.b16 %v2275
    %v2600 = vunpack.c.l.b16 %v2276
    %v2601 = vunpack.c.h.b16 %v2276
    %v2602 = vunpack.c.l.b16 %v2277
    %v2603 = vunpack.c.h.b16 %v2277
    %v2604 = vunpack.c.l.b16 %v2278
    %v2605 = vunpack.c.h.b16 %v2278
    %v2606 = vunpack.c.l.b16 %v2279
    %v2607 = vunpack.c.h.b16 %v2279
    %v2608 = vunpack.c.l.b16 %v2280
    %v2609 = vunpack.c.h.b16 %v2280
    %v2610 = vunpack.c.l.b16 %v2281
    %v2611 = vunpack.c.h.b16 %v2281
    %v2612 = vunpack.c.l.b16 %v2282
    %v2613 = vunpack.c.h.b16 %v2282
    %v2614 = vunpack.c.l.b16 %v2283
    %v2615 = vunpack.c.h.b16 %v2283
    %v2616 = vunpack.c.l.b16 %v2284
    %v2617 = vunpack.c.h.b16 %v2284
    %v2618 = vunpack.c.l.b16 %v2285
    %v2619 = vunpack.c.h.b16 %v2285
    %v2620 = vunpack.c.l.b16 %v2286
    %v2621 = vunpack.c.h.b16 %v2286
    %v2622 = vunpack.c.l.b16 %v2287
    %v2623 = vunpack.c.h.b16 %v2287
    %v2624 = vunpack.c.l.b16 %v2288
    %v2625 = vunpack.c.h.b16 %v2288
    %v2626 = vunpack.c.l.b16 %v2289
    %v2627 = vunpack.c.h.b16 %v2289
    %v2628 = vunpack.c.l.b16 %v2290
    %v2629 = vunpack.c.h.b16 %v2290
    %v2630 = vunpack.c.l.b16 %v2291
    %v2631 = vunpack.c.h.b16 %v2291
    %v2632 = vunpack.c.l.b16 %v2292
    %v2633 = vunpack.c.h.b16 %v2292
    %v2634 = vunpack.c.l.b16 %v2293
    %v2635 = vunpack.c.h.b16 %v2293
    %v2636 = vunpack.c.l.b16 %v2294
    %v2637 = vunpack.c.h.b16 %v2294
    %v2638 = vunpack.c.l.b16 %v2295
    %v2639 = vunpack.c.h.b16 %v2295
    %v2640 = vunpack.c.l.b16 %v2296
    %v2641 = vunpack.c.h.b16 %v2296
    %v2642 = vunpack.c.l.b16 %v2297
    %v2643 = vunpack.c.h.b16 %v2297
    %v2644 = vunpack.c.l.b16 %v2298
    %v2645 = vunpack.c.h.b16 %v2298
    %v2646 = vunpack.c.l.b16 %v2299
    %v2647 = vunpack.c.h.b16 %v2299
    %v2648 = vunpack.c.l.b16 %v2300
    %v2649 = vunpack.c.h.b16 %v2300
    %v2650 = vunpack.c.l.b16 %v2301
    %v2651 = vunpack.c.h.b16 %v2301
    %v2652 = vunpack.c.l.b16 %v2302
    %v2653 = vunpack.c.h.b16 %v2302
    %v2654 = vunpack.c.l.b16 %v2303
    %v2655 = vunpack.c.h.b16 %v2303
    %v2656 = vunpack.c.l.b16 %v2304
    %v2657 = vunpack.c.h.b16 %v2304
    %v2658 = vunpack.c.l.b16 %v2305
    %v2659 = vunpack.c.h.b16 %v2305
    %v2660 = vunpack.c.l.b16 %v2306
    %v2661 = vunpack.c.h.b16 %v2306
    %v2662 = vunpack.c.l.b16 %v2307
    %v2663 = vunpack.c.h.b16 %v2307
    %v2664 = vunpack.c.l.b16 %v2308
    %v2665 = vunpack.c.h.b16 %v2308
    %v2666 = vunpack.c.l.b16 %v2309
    %v2667 = vunpack.c.h.b16 %v2309
    %v2668 = vunpack.c.l.b16 %v2310
    %v2669 = vunpack.c.h.b16 %v2310
    %v2670 = vunpack.c.l.b16 %v2311
    %v2671 = vunpack.c.h.b16 %v2311
    %v2672 = vunpack.c.l.b16 %v2312
    %v2673 = vunpack.c.h.b16 %v2312
    %v2674 = vunpack.c.l.b16 %v2313
    %v2675 = vunpack.c.h.b16 %v2313
    %v2676 = vunpack.c.l.b16 %v2314
    %v2677 = vunpack.c.h.b16 %v2314
    %v2678 = vunpack.c.l.b16 %v2315
    %v2679 = vunpack.c.h.b16 %v2315
    %v2680 = vunpack.c.l.b16 %v2316
    %v2681 = vunpack.c.h.b16 %v2316
    %v2682 = vunpack.c.l.b16 %v2317
    %v2683 = vunpack.c.h.b16 %v2317
    %v2684 = vunpack.c.l.b16 %v2318
    %v2685 = vunpack.c.h.b16 %v2318
    %v2686 = vunpack.c.l.b16 %v2319
    %v2687 = vunpack.c.h.b16 %v2319
    %v2688 = vunpack.c.l.b16 %v2320
    %v2689 = vunpack.c.h.b16 %v2320
    %v2690 = vunpack.c.l.b16 %v2321
    %v2691 = vunpack.c.h.b16 %v2321
    %v2692 = vunpack.c.l.b16 %v2322
    %v2693 = vunpack.c.h.b16 %v2322
    %v2694 = vunpack.c.l.b16 %v2323
    %v2695 = vunpack.c.h.b16 %v2323
    %v2696 = vunpack.c.l.b16 %v2324
    %v2697 = vunpack.c.h.b16 %v2324
    %v2698 = vunpack.c.l.b16 %v2325
    %v2699 = vunpack.c.h.b16 %v2325
    %v2700 = vunpack.c.l.b16 %v2326
    %v2701 = vunpack.c.h.b16 %v2326
    %v2702 = vunpack.c.l.b16 %v2327
    %v2703 = vunpack.c.h.b16 %v2327
    %v2704 = vunpack.c.l.b16 %v2328
    %v2705 = vunpack.c.h.b16 %v2328
    %v2706 = vunpack.c.l.b16 %v2329
    %v2707 = vunpack.c.h.b16 %v2329
    %v2708 = vunpack.c.l.b16 %v2330
    %v2709 = vunpack.c.h.b16 %v2330
    %v2710 = vunpack.c.l.b16 %v2331
    %v2711 = vunpack.c.h.b16 %v2331
    %v2712 = vunpack.c.l.b16 %v2332
    %v2713 = vunpack.c.h.b16 %v2332
    %v2714 = vunpack.c.l.b16 %v2333
    %v2715 = vunpack.c.h.b16 %v2333
    %v2716 = vunpack.c.l.b16 %v2334
    %v2717 = vunpack.c.h.b16 %v2334
    %v2718 = vunpack.c.l.b16 %v2335
    %v2719 = vunpack.c.h.b16 %v2335
    %v2720 = vunpack.c.l.b16 %v2336
    %v2721 = vunpack.c.h.b16 %v2336
    %v2722 = vunpack.c.l.b16 %v2337
    %v2723 = vunpack.c.h.b16 %v2337
    %v2724 = vunpack.c.l.b16 %v2338
    %v2725 = vunpack.c.h.b16 %v2338
    %v2726 = vunpack.c.l.b16 %v2339
    %v2727 = vunpack.c.h.b16 %v2339
    %v2728 = vunpack.c.l.b16 %v2340
    %v2729 = vunpack.c.h.b16 %v2340
    %v2730 = vunpack.c.l.b16 %v2341
    %v2731 = vunpack.c.h.b16 %v2341
    %v2732 = vunpack.c.l.b16 %v2342
    %v2733 = vunpack.c.h.b16 %v2342
    %v2734 = vunpack.c.l.b16 %v2343
    %v2735 = vunpack.c.h.b16 %v2343
    %v2736 = vunpack.c.l.b16 %v2344
    %v2737 = vunpack.c.h.b16 %v2344
    %v2738 = vunpack.c.l.b16 %v2345
    %v2739 = vunpack.c.h.b16 %v2345
    %v2740 = vpack.c.b16 %v2488, %v2484
    %v2741 = vpack.c.b16 %v2489, %v2485
    %v2742 = vpack.c.b16 %v2490, %v2486
    %v2743 = vpack.c.b16 %v2491, %v2487
    %v2744 = vpack.c.b16 %v2496, %v2492
    %v2745 = vpack.c.b16 %v2497, %v2493
    %v2746 = vpack.c.b16 %v2498, %v2494
    %v2747 = vpack.c.b16 %v2499, %v2495
    %v2748 = vpack.c.b16 %v2504, %v2500
    %v2749 = vpack.c.b16 %v2505, %v2501
    %v2750 = vpack.c.b16 %v2506, %v2502
    %v2751 = vpack.c.b16 %v2507, %v2503
    %v2752 = vpack.c.b16 %v2512, %v2508
    %v2753 = vpack.c.b16 %v2513, %v2509
    %v2754 = vpack.c.b16 %v2514, %v2510
    %v2755 = vpack.c.b16 %v2515, %v2511
    %v2756 = vpack.c.b16 %v2520, %v2516
    %v2757 = vpack.c.b16 %v2521, %v2517
    %v2758 = vpack.c.b16 %v2522, %v2518
    %v2759 = vpack.c.b16 %v2523, %v2519
    %v2760 = vpack.c.b16 %v2528, %v2524
    %v2761 = vpack.c.b16 %v2529, %v2525
    %v2762 = vpack.c.b16 %v2530, %v2526
    %v2763 = vpack.c.b16 %v2531, %v2527
    %v2764 = vpack.c.b16 %v2536, %v2532
    %v2765 = vpack.c.b16 %v2537, %v2533
    %v2766 = vpack.c.b16 %v2538, %v2534
    %v2767 = vpack.c.b16 %v2539, %v2535
    %v2768 = vpack.c.b16 %v2544, %v2540
    %v2769 = vpack.c.b16 %v2545, %v2541
    %v2770 = vpack.c.b16 %v2546, %v2542
    %v2771 = vpack.c.b16 %v2547, %v2543
    %v2772 = vpack.c.b16 %v2552, %v2548
    %v2773 = vpack.c.b16 %v2553, %v2549
    %v2774 = vpack.c.b16 %v2554, %v2550
    %v2775 = vpack.c.b16 %v2555, %v2551
    %v2776 = vpack.c.b16 %v2560, %v2556
    %v2777 = vpack.c.b16 %v2561, %v2557
    %v2778 = vpack.c.b16 %v2562, %v2558
    %v2779 = vpack.c.b16 %v2563, %v2559
    %v2780 = vpack.c.b16 %v2568, %v2564
    %v2781 = vpack.c.b16 %v2569, %v2565
    %v2782 = vpack.c.b16 %v2570, %v2566
    %v2783 = vpack.c.b16 %v2571, %v2567
    %v2784 = vpack.c.b16 %v2576, %v2572
    %v2785 = vpack.c.b16 %v2577, %v2573
    %v2786 = vpack.c.b16 %v2578, %v2574
    %v2787 = vpack.c.b16 %v2579, %v2575
    %v2788 = vpack.c.b16 %v2584, %v2580
    %v2789 = vpack.c.b16 %v2585, %v2581
    %v2790 = vpack.c.b16 %v2586, %v2582
    %v2791 = vpack.c.b16 %v2587, %v2583
    %v2792 = vpack.c.b16 %v2592, %v2588
    %v2793 = vpack.c.b16 %v2593, %v2589
    %v2794 = vpack.c.b16 %v2594, %v2590
    %v2795 = vpack.c.b16 %v2595, %v2591
    %v2796 = vpack.c.b16 %v2600, %v2596
    %v2797 = vpack.c.b16 %v2601, %v2597
    %v2798 = vpack.c.b16 %v2602, %v2598
    %v2799 = vpack.c.b16 %v2603, %v2599
    %v2800 = vpack.c.b16 %v2608, %v2604
    %v2801 = vpack.c.b16 %v2609, %v2605
    %v2802 = vpack.c.b16 %v2610, %v2606
    %v2803 = vpack.c.b16 %v2611, %v2607
    %v2804 = vpack.c.b16 %v2616, %v2612
    %v2805 = vpack.c.b16 %v2617, %v2613
    %v2806 = vpack.c.b16 %v2618, %v2614
    %v2807 = vpack.c.b16 %v2619, %v2615
    %v2808 = vpack.c.b16 %v2624, %v2620
    %v2809 = vpack.c.b16 %v2625, %v2621
    %v2810 = vpack.c.b16 %v2626, %v2622
    %v2811 = vpack.c.b16 %v2627, %v2623
    %v2812 = vpack.c.b16 %v2632, %v2628
    %v2813 = vpack.c.b16 %v2633, %v2629
    %v2814 = vpack.c.b16 %v2634, %v2630
    %v2815 = vpack.c.b16 %v2635, %v2631
    %v2816 = vpack.c.b16 %v2640, %v2636
    %v2817 = vpack.c.b16 %v2641, %v2637
    %v2818 = vpack.c.b16 %v2642, %v2638
    %v2819 = vpack.c.b16 %v2643, %v2639
    %v2820 = vpack.c.b16 %v2648, %v2644
    %v2821 = vpack.c.b16 %v2649, %v2645
    %v2822 = vpack.c.b16 %v2650, %v2646
    %v2823 = vpack.c.b16 %v2651, %v2647
    %v2824 = vpack.c.b16 %v2656, %v2652
    %v2825 = vpack.c.b16 %v2657, %v2653
    %v2826 = vpack.c.b16 %v2658, %v2654
    %v2827 = vpack.c.b16 %v2659, %v2655
    %v2828 = vpack.c.b16 %v2664, %v2660
    %v2829 = vpack.c.b16 %v2665, %v2661
    %v2830 = vpack.c.b16 %v2666, %v2662
    %v2831 = vpack.c.b16 %v2667, %v2663
    %v2832 = vpack.c.b16 %v2672, %v2668
    %v2833 = vpack.c.b16 %v2673, %v2669
    %v2834 = vpack.c.b16 %v2674, %v2670
    %v2835 = vpack.c.b16 %v2675, %v2671
    %v2836 = vpack.c.b16 %v2680, %v2676
    %v2837 = vpack.c.b16 %v2681, %v2677
    %v2838 = vpack.c.b16 %v2682, %v2678
    %v2839 = vpack.c.b16 %v2683, %v2679
    %v2840 = vpack.c.b16 %v2688, %v2684
    %v2841 = vpack.c.b16 %v2689, %v2685
    %v2842 = vpack.c.b16 %v2690, %v2686
    %v2843 = vpack.c.b16 %v2691, %v2687
    %v2844 = vpack.c.b16 %v2696, %v2692
    %v2845 = vpack.c.b16 %v2697, %v2693
    %v2846 = vpack.c.b16 %v2698, %v2694
    %v2847 = vpack.c.b16 %v2699, %v2695
    %v2848 = vpack.c.b16 %v2704, %v2700
    %v2849 = vpack.c.b16 %v2705, %v2701
    %v2850 = vpack.c.b16 %v2706, %v2702
    %v2851 = vpack.c.b16 %v2707, %v2703
    %v2852 = vpack.c.b16 %v2712, %v2708
    %v2853 = vpack.c.b16 %v2713, %v2709
    %v2854 = vpack.c.b16 %v2714, %v2710
    %v2855 = vpack.c.b16 %v2715, %v2711
    %v2856 = vpack.c.b16 %v2720, %v2716
    %v2857 = vpack.c.b16 %v2721, %v2717
    %v2858 = vpack.c.b16 %v2722, %v2718
    %v2859 = vpack.c.b16 %v2723, %v2719
    %v2860 = vpack.c.b16 %v2728, %v2724
    %v2861 = vpack.c.b16 %v2729, %v2725
    %v2862 = vpack.c.b16 %v2730, %v2726
    %v2863 = vpack.c.b16 %v2731, %v2727
    %v2864 = vpack.c.b16 %v2736, %v2732
    %v2865 = vpack.c.b16 %v2737, %v2733
    %v2866 = vpack.c.b16 %v2738, %v2734
    %v2867 = vpack.c.b16 %v2739, %v2735
    %2996 = vmatpush.bf16.msra.mxu0 %v2768
    %2997 = vmatpush.bf16.msra.mxu0 %v2764
    %2998 = vmatpush.bf16.msra.mxu0 %v2760
    %2999 = vmatpush.bf16.msra.mxu0 %v2756
    %3000 = vmatpush.bf16.msra.mxu0 %v2752
    %3001 = vmatpush.bf16.msra.mxu0 %v2748
    %3002 = vmatpush.bf16.msra.mxu0 %v2744
    %3003 = vmatpush.bf16.msra.mxu0 %v2740
    %3004 = vmatmul.bf16.gmra.mxu0 %v2214
    %v3005 = vpop.f32.mrf.mxu0
    %v3006 = vadd.f32 %v2348, %v3005
    %v3007 = vpop.f32.mrf.mxu0
    %v3008 = vadd.f32 %v2348, %v3007
    %3009 = vdwg.mxu0
    %3010 = vmatpush.bf16.msra.mxu0 %v2800
    %3011 = vmatpush.bf16.msra.mxu0 %v2796
    %3012 = vmatpush.bf16.msra.mxu0 %v2792
    %3013 = vmatpush.bf16.msra.mxu0 %v2788
    %3014 = vmatpush.bf16.msra.mxu0 %v2784
    %3015 = vmatpush.bf16.msra.mxu0 %v2780
    %3016 = vmatpush.bf16.msra.mxu0 %v2776
    %3017 = vmatpush.bf16.msra.mxu0 %v2772
    %3018 = vmatmul.bf16.gmra.mxu0 %v2215
    %v3019 = vpop.f32.mrf.mxu0
    %v3020 = vadd.f32 %v3006, %v3019
    %v3021 = vpop.f32.mrf.mxu0
    %v3022 = vadd.f32 %v3008, %v3021
    %3023 = vdwg.mxu0
    %3024 = vmatpush.bf16.msra.mxu0 %v2832
    %3025 = vmatpush.bf16.msra.mxu0 %v2828
    %3026 = vmatpush.bf16.msra.mxu0 %v2824
    %3027 = vmatpush.bf16.msra.mxu0 %v2820
    %3028 = vmatpush.bf16.msra.mxu0 %v2816
    %3029 = vmatpush.bf16.msra.mxu0 %v2812
    %3030 = vmatpush.bf16.msra.mxu0 %v2808
    %3031 = vmatpush.bf16.msra.mxu0 %v2804
    %3032 = vmatmul.bf16.gmra.mxu0 %v2216
    %v3033 = vpop.f32.mrf.mxu0
    %v3034 = vadd.f32 %v3020, %v3033
    %v3035 = vpop.f32.mrf.mxu0
    %v3036 = vadd.f32 %v3022, %v3035
    %3037 = vdwg.mxu0
    %3038 = vmatpush.bf16.msra.mxu0 %v2864
    %3039 = vmatpush.bf16.msra.mxu0 %v2860
    %3040 = vmatpush.bf16.msra.mxu0 %v2856
    %3041 = vmatpush.bf16.msra.mxu0 %v2852
    %3042 = vmatpush.bf16.msra.mxu0 %v2848
    %3043 = vmatpush.bf16.msra.mxu0 %v2844
    %3044 = vmatpush.bf16.msra.mxu0 %v2840
    %3045 = vmatpush.bf16.msra.mxu0 %v2836
    %3046 = vmatmul.bf16.gmra.mxu0 %v2217
    %v3047 = vpop.f32.mrf.mxu0
    %v3048 = vadd.f32 %v3034, %v3047
    %v3049 = vpop.f32.mrf.mxu0
    %v3050 = vadd.f32 %v3036, %v3049
    %3051 = vdwg.mxu0
    %3052 = vmatpush.bf16.msra.mxu0 %v2769
    %3053 = vmatpush.bf16.msra.mxu0 %v2765
    %3054 = vmatpush.bf16.msra.mxu0 %v2761
    %3055 = vmatpush.bf16.msra.mxu0 %v2757
    %3056 = vmatpush.bf16.msra.mxu0 %v2753
    %3057 = vmatpush.bf16.msra.mxu0 %v2749
    %3058 = vmatpush.bf16.msra.mxu0 %v2745
    %3059 = vmatpush.bf16.msra.mxu0 %v2741
    %3060 = vmatmul.bf16.gmra.mxu0 %v2214
    %v3061 = vpop.f32.mrf.mxu0
    %v3062 = vadd.f32 %v2349, %v3061
    %v3063 = vpop.f32.mrf.mxu0
    %v3064 = vadd.f32 %v2349, %v3063
    %3065 = vdwg.mxu0
    %3066 = vmatpush.bf16.msra.mxu0 %v2801
    %3067 = vmatpush.bf16.msra.mxu0 %v2797
    %3068 = vmatpush.bf16.msra.mxu0 %v2793
    %3069 = vmatpush.bf16.msra.mxu0 %v2789
    %3070 = vmatpush.bf16.msra.mxu0 %v2785
    %3071 = vmatpush.bf16.msra.mxu0 %v2781
    %3072 = vmatpush.bf16.msra.mxu0 %v2777
    %3073 = vmatpush.bf16.msra.mxu0 %v2773
    %3074 = vmatmul.bf16.gmra.mxu0 %v2215
    %v3075 = vpop.f32.mrf.mxu0
    %v3076 = vadd.f32 %v3062, %v3075
    %v3077 = vpop.f32.mrf.mxu0
    %v3078 = vadd.f32 %v3064, %v3077
    %3079 = vdwg.mxu0
    %3080 = vmatpush.bf16.msra.mxu0 %v2833
    %3081 = vmatpush.bf16.msra.mxu0 %v2829
    %3082 = vmatpush.bf16.msra.mxu0 %v2825
    %3083 = vmatpush.bf16.msra.mxu0 %v2821
    %3084 = vmatpush.bf16.msra.mxu0 %v2817
    %3085 = vmatpush.bf16.msra.mxu0 %v2813
    %3086 = vmatpush.bf16.msra.mxu0 %v2809
    %3087 = vmatpush.bf16.msra.mxu0 %v2805
    %3088 = vmatmul.bf16.gmra.mxu0 %v2216
    %v3089 = vpop.f32.mrf.mxu0
    %v3090 = vadd.f32 %v3076, %v3089
    %v3091 = vpop.f32.mrf.mxu0
    %v3092 = vadd.f32 %v3078, %v3091
    %3093 = vdwg.mxu0
    %3094 = vmatpush.bf16.msra.mxu0 %v2865
    %3095 = vmatpush.bf16.msra.mxu0 %v2861
    %3096 = vmatpush.bf16.msra.mxu0 %v2857
    %3097 = vmatpush.bf16.msra.mxu0 %v2853
    %3098 = vmatpush.bf16.msra.mxu0 %v2849
    %3099 = vmatpush.bf16.msra.mxu0 %v2845
    %3100 = vmatpush.bf16.msra.mxu0 %v2841
    %3101 = vmatpush.bf16.msra.mxu0 %v2837
    %3102 = vmatmul.bf16.gmra.mxu0 %v2217
    %v3103 = vpop.f32.mrf.mxu0
    %v3104 = vadd.f32 %v3090, %v3103
    %v3105 = vpop.f32.mrf.mxu0
    %v3106 = vadd.f32 %v3092, %v3105
    %3107 = vdwg.mxu0
    %3108 = vmatpush.bf16.msra.mxu0 %v2770
    %3109 = vmatpush.bf16.msra.mxu0 %v2766
    %3110 = vmatpush.bf16.msra.mxu0 %v2762
    %3111 = vmatpush.bf16.msra.mxu0 %v2758
    %3112 = vmatpush.bf16.msra.mxu0 %v2754
    %3113 = vmatpush.bf16.msra.mxu0 %v2750
    %3114 = vmatpush.bf16.msra.mxu0 %v2746
    %3115 = vmatpush.bf16.msra.mxu0 %v2742
    %3116 = vmatmul.bf16.gmra.mxu0 %v2214
    %v3117 = vpop.f32.mrf.mxu0
    %v3118 = vadd.f32 %v2350, %v3117
    %v3119 = vpop.f32.mrf.mxu0
    %v3120 = vadd.f32 %v2350, %v3119
    %3121 = vdwg.mxu0
    %3122 = vmatpush.bf16.msra.mxu0 %v2802
    %3123 = vmatpush.bf16.msra.mxu0 %v2798
    %3124 = vmatpush.bf16.msra.mxu0 %v2794
    %3125 = vmatpush.bf16.msra.mxu0 %v2790
    %3126 = vmatpush.bf16.msra.mxu0 %v2786
    %3127 = vmatpush.bf16.msra.mxu0 %v2782
    %3128 = vmatpush.bf16.msra.mxu0 %v2778
    %3129 = vmatpush.bf16.msra.mxu0 %v2774
    %3130 = vmatmul.bf16.gmra.mxu0 %v2215
    %v3131 = vpop.f32.mrf.mxu0
    %v3132 = vadd.f32 %v3118, %v3131
    %v3133 = vpop.f32.mrf.mxu0
    %v3134 = vadd.f32 %v3120, %v3133
    %3135 = vdwg.mxu0
    %3136 = vmatpush.bf16.msra.mxu0 %v2834
    %3137 = vmatpush.bf16.msra.mxu0 %v2830
    %3138 = vmatpush.bf16.msra.mxu0 %v2826
    %3139 = vmatpush.bf16.msra.mxu0 %v2822
    %3140 = vmatpush.bf16.msra.mxu0 %v2818
    %3141 = vmatpush.bf16.msra.mxu0 %v2814
    %3142 = vmatpush.bf16.msra.mxu0 %v2810
    %3143 = vmatpush.bf16.msra.mxu0 %v2806
    %3144 = vmatmul.bf16.gmra.mxu0 %v2216
    %v3145 = vpop.f32.mrf.mxu0
    %v3146 = vadd.f32 %v3132, %v3145
    %v3147 = vpop.f32.mrf.mxu0
    %v3148 = vadd.f32 %v3134, %v3147
    %3149 = vdwg.mxu0
    %3150 = vmatpush.bf16.msra.mxu0 %v2866
    %3151 = vmatpush.bf16.msra.mxu0 %v2862
    %3152 = vmatpush.bf16.msra.mxu0 %v2858
    %3153 = vmatpush.bf16.msra.mxu0 %v2854
    %3154 = vmatpush.bf16.msra.mxu0 %v2850
    %3155 = vmatpush.bf16.msra.mxu0 %v2846
    %3156 = vmatpush.bf16.msra.mxu0 %v2842
    %3157 = vmatpush.bf16.msra.mxu0 %v2838
    %3158 = vmatmul.bf16.gmra.mxu0 %v2217
    %v3159 = vpop.f32.mrf.mxu0
    %v3160 = vadd.f32 %v3146, %v3159
    %v3161 = vpop.f32.mrf.mxu0
    %v3162 = vadd.f32 %v3148, %v3161
    %3163 = vdwg.mxu0
    %3164 = vmatpush.bf16.msra.mxu0 %v2771
    %3165 = vmatpush.bf16.msra.mxu0 %v2767
    %3166 = vmatpush.bf16.msra.mxu0 %v2763
    %3167 = vmatpush.bf16.msra.mxu0 %v2759
    %3168 = vmatpush.bf16.msra.mxu0 %v2755
    %3169 = vmatpush.bf16.msra.mxu0 %v2751
    %3170 = vmatpush.bf16.msra.mxu0 %v2747
    %3171 = vmatpush.bf16.msra.mxu0 %v2743
    %3172 = vmatmul.bf16.gmra.mxu0 %v2214
    %v3173 = vpop.f32.mrf.mxu0
    %v3174 = vadd.f32 %v2351, %v3173
    %v3175 = vpop.f32.mrf.mxu0
    %v3176 = vadd.f32 %v2351, %v3175
    %3177 = vdwg.mxu0
    %3178 = vmatpush.bf16.msra.mxu0 %v2803
    %3179 = vmatpush.bf16.msra.mxu0 %v2799
    %3180 = vmatpush.bf16.msra.mxu0 %v2795
    %3181 = vmatpush.bf16.msra.mxu0 %v2791
    %3182 = vmatpush.bf16.msra.mxu0 %v2787
    %3183 = vmatpush.bf16.msra.mxu0 %v2783
    %3184 = vmatpush.bf16.msra.mxu0 %v2779
    %3185 = vmatpush.bf16.msra.mxu0 %v2775
    %3186 = vmatmul.bf16.gmra.mxu0 %v2215
    %v3187 = vpop.f32.mrf.mxu0
    %v3188 = vadd.f32 %v3174, %v3187
    %v3189 = vpop.f32.mrf.mxu0
    %v3190 = vadd.f32 %v3176, %v3189
    %3191 = vdwg.mxu0
    %3192 = vmatpush.bf16.msra.mxu0 %v2835
    %3193 = vmatpush.bf16.msra.mxu0 %v2831
    %3194 = vmatpush.bf16.msra.mxu0 %v2827
    %3195 = vmatpush.bf16.msra.mxu0 %v2823
    %3196 = vmatpush.bf16.msra.mxu0 %v2819
    %3197 = vmatpush.bf16.msra.mxu0 %v2815
    %3198 = vmatpush.bf16.msra.mxu0 %v2811
    %3199 = vmatpush.bf16.msra.mxu0 %v2807
    %3200 = vmatmul.bf16.gmra.mxu0 %v2216
    %v3201 = vpop.f32.mrf.mxu0
    %v3202 = vadd.f32 %v3188, %v3201
    %v3203 = vpop.f32.mrf.mxu0
    %v3204 = vadd.f32 %v3190, %v3203
    %3205 = vdwg.mxu0
    %3206 = vmatpush.bf16.msra.mxu0 %v2867
    %3207 = vmatpush.bf16.msra.mxu0 %v2863
    %3208 = vmatpush.bf16.msra.mxu0 %v2859
    %3209 = vmatpush.bf16.msra.mxu0 %v2855
    %3210 = vmatpush.bf16.msra.mxu0 %v2851
    %3211 = vmatpush.bf16.msra.mxu0 %v2847
    %3212 = vmatpush.bf16.msra.mxu0 %v2843
    %3213 = vmatpush.bf16.msra.mxu0 %v2839
    %3214 = vmatmul.bf16.gmra.mxu0 %v2217
    %v3215 = vpop.f32.mrf.mxu0
    %v3216 = vadd.f32 %v3202, %v3215
    %v3217 = vpop.f32.mrf.mxu0
    %v3218 = vadd.f32 %v3204, %v3217
    %3219 = vdwg.mxu0
    %v3220 = vmax.f32 %v3048, 0.0
    %v3221 = vmax.f32 %v3104, 0.0
    %v3222 = vmax.f32 %v3160, 0.0
    %v3223 = vmax.f32 %v3216, 0.0
    %v3224 = vmax.f32 %v3050, 0.0
    %v3225 = vmax.f32 %v3106, 0.0
    %v3226 = vmax.f32 %v3162, 0.0
    %v3227 = vmax.f32 %v3218, 0.0
    %v3228 = vpack.c.bf16 %v3224, %v3220
    %v3229 = vpack.c.bf16 %v3225, %v3221
    %v3230 = vpack.c.bf16 %v3226, %v3222
    %v3231 = vpack.c.bf16 %v3227, %v3223
    %v3232 = vld [vmem:[#allocation11] sm:$0xf]
    %v3233 = vld [vmem:[#allocation11 + $0x4] sm:$0xf]
    %v3234 = vld [vmem:[#allocation11 + $0x8] sm:$0xf]
    %v3235 = vld [vmem:[#allocation11 + $0xc] sm:$0xf]
    %v3236 = vld [vmem:[#allocation11 + $0x10] sm:$0xf]
    %v3237 = vld [vmem:[#allocation11 + $0x14] sm:$0xf]
    %v3238 = vld [vmem:[#allocation11 + $0x18] sm:$0xf]
    %v3239 = vld [vmem:[#allocation11 + $0x1c] sm:$0xf]
    %v3240 = vld [vmem:[#allocation11 + $0x20] sm:$0xf]
    %v3241 = vld [vmem:[#allocation11 + $0x24] sm:$0xf]
    %v3242 = vld [vmem:[#allocation11 + $0x28] sm:$0xf]
    %v3243 = vld [vmem:[#allocation11 + $0x2c] sm:$0xf]
    %v3244 = vld [vmem:[#allocation11 + $0x30] sm:$0xf]
    %v3245 = vld [vmem:[#allocation11 + $0x34] sm:$0xf]
    %v3246 = vld [vmem:[#allocation11 + $0x38] sm:$0xf]
    %v3247 = vld [vmem:[#allocation11 + $0x3c] sm:$0xf]
    %v3248 = vld [vmem:[#allocation11 + $0x40] sm:$0xf]
    %v3249 = vld [vmem:[#allocation11 + $0x44] sm:$0xf]
    %v3250 = vld [vmem:[#allocation11 + $0x48] sm:$0xf]
    %v3251 = vld [vmem:[#allocation11 + $0x4c] sm:$0xf]
    %v3252 = vld [vmem:[#allocation11 + $0x50] sm:$0xf]
    %v3253 = vld [vmem:[#allocation11 + $0x54] sm:$0xf]
    %v3254 = vld [vmem:[#allocation11 + $0x58] sm:$0xf]
    %v3255 = vld [vmem:[#allocation11 + $0x5c] sm:$0xf]
    %v3256 = vld [vmem:[#allocation11 + $0x60] sm:$0xf]
    %v3257 = vld [vmem:[#allocation11 + $0x64] sm:$0xf]
    %v3258 = vld [vmem:[#allocation11 + $0x68] sm:$0xf]
    %v3259 = vld [vmem:[#allocation11 + $0x6c] sm:$0xf]
    %v3260 = vld [vmem:[#allocation11 + $0x70] sm:$0xf]
    %v3261 = vld [vmem:[#allocation11 + $0x74] sm:$0xf]
    %v3262 = vld [vmem:[#allocation11 + $0x78] sm:$0xf]
    %v3263 = vld [vmem:[#allocation11 + $0x7c] sm:$0xf]
    %v3264 = vld [vmem:[#allocation11 + $0x80] sm:$0xf]
    %v3265 = vld [vmem:[#allocation11 + $0x84] sm:$0xf]
    %v3266 = vld [vmem:[#allocation11 + $0x88] sm:$0xf]
    %v3267 = vld [vmem:[#allocation11 + $0x8c] sm:$0xf]
    %v3268 = vld [vmem:[#allocation11 + $0x90] sm:$0xf]
    %v3269 = vld [vmem:[#allocation11 + $0x94] sm:$0xf]
    %v3270 = vld [vmem:[#allocation11 + $0x98] sm:$0xf]
    %v3271 = vld [vmem:[#allocation11 + $0x9c] sm:$0xf]
    %v3272 = vld [vmem:[#allocation11 + $0xa0] sm:$0xf]
    %v3273 = vld [vmem:[#allocation11 + $0xa4] sm:$0xf]
    %v3274 = vld [vmem:[#allocation11 + $0xa8] sm:$0xf]
    %v3275 = vld [vmem:[#allocation11 + $0xac] sm:$0xf]
    %v3276 = vld [vmem:[#allocation11 + $0xb0] sm:$0xf]
    %v3277 = vld [vmem:[#allocation11 + $0xb4] sm:$0xf]
    %v3278 = vld [vmem:[#allocation11 + $0xb8] sm:$0xf]
    %v3279 = vld [vmem:[#allocation11 + $0xbc] sm:$0xf]
    %v3280 = vld [vmem:[#allocation11 + $0xc0] sm:$0xf]
    %v3281 = vld [vmem:[#allocation11 + $0xc4] sm:$0xf]
    %v3282 = vld [vmem:[#allocation11 + $0xc8] sm:$0xf]
    %v3283 = vld [vmem:[#allocation11 + $0xcc] sm:$0xf]
    %v3284 = vld [vmem:[#allocation11 + $0xd0] sm:$0xf]
    %v3285 = vld [vmem:[#allocation11 + $0xd4] sm:$0xf]
    %v3286 = vld [vmem:[#allocation11 + $0xd8] sm:$0xf]
    %v3287 = vld [vmem:[#allocation11 + $0xdc] sm:$0xf]
    %v3288 = vld [vmem:[#allocation11 + $0xe0] sm:$0xf]
    %v3289 = vld [vmem:[#allocation11 + $0xe4] sm:$0xf]
    %v3290 = vld [vmem:[#allocation11 + $0xe8] sm:$0xf]
    %v3291 = vld [vmem:[#allocation11 + $0xec] sm:$0xf]
    %v3292 = vld [vmem:[#allocation11 + $0xf0] sm:$0xf]
    %v3293 = vld [vmem:[#allocation11 + $0xf4] sm:$0xf]
    %v3294 = vld [vmem:[#allocation11 + $0xf8] sm:$0xf]
    %v3295 = vld [vmem:[#allocation11 + $0xfc] sm:$0xf]
    %v3296 = vld [vmem:[%s6] sm:$0x1]
    %v3298 = vperm.slane %v3296, 0
    %v3364 = vunpack.c.l.b16 %v3232
    %v3365 = vunpack.c.l.b16 %v3233
    %v3366 = vunpack.c.l.b16 %v3234
    %v3367 = vunpack.c.l.b16 %v3235
    %v3368 = vunpack.c.l.b16 %v3236
    %v3369 = vunpack.c.l.b16 %v3237
    %v3370 = vunpack.c.l.b16 %v3238
    %v3371 = vunpack.c.l.b16 %v3239
    %v3372 = vunpack.c.l.b16 %v3240
    %v3373 = vunpack.c.l.b16 %v3241
    %v3374 = vunpack.c.l.b16 %v3242
    %v3375 = vunpack.c.l.b16 %v3243
    %v3376 = vunpack.c.l.b16 %v3244
    %v3377 = vunpack.c.l.b16 %v3245
    %v3378 = vunpack.c.l.b16 %v3246
    %v3379 = vunpack.c.l.b16 %v3247
    %v3380 = vunpack.c.l.b16 %v3248
    %v3381 = vunpack.c.l.b16 %v3249
    %v3382 = vunpack.c.l.b16 %v3250
    %v3383 = vunpack.c.l.b16 %v3251
    %v3384 = vunpack.c.l.b16 %v3252
    %v3385 = vunpack.c.l.b16 %v3253
    %v3386 = vunpack.c.l.b16 %v3254
    %v3387 = vunpack.c.l.b16 %v3255
    %v3388 = vunpack.c.l.b16 %v3256
    %v3389 = vunpack.c.l.b16 %v3257
    %v3390 = vunpack.c.l.b16 %v3258
    %v3391 = vunpack.c.l.b16 %v3259
    %v3392 = vunpack.c.l.b16 %v3260
    %v3393 = vunpack.c.l.b16 %v3261
    %v3394 = vunpack.c.l.b16 %v3262
    %v3395 = vunpack.c.l.b16 %v3263
    %v3396 = vunpack.c.l.b16 %v3264
    %v3397 = vunpack.c.l.b16 %v3265
    %v3398 = vunpack.c.l.b16 %v3266
    %v3399 = vunpack.c.l.b16 %v3267
    %v3400 = vunpack.c.l.b16 %v3268
    %v3401 = vunpack.c.l.b16 %v3269
    %v3402 = vunpack.c.l.b16 %v3270
    %v3403 = vunpack.c.l.b16 %v3271
    %v3404 = vunpack.c.l.b16 %v3272
    %v3405 = vunpack.c.l.b16 %v3273
    %v3406 = vunpack.c.l.b16 %v3274
    %v3407 = vunpack.c.l.b16 %v3275
    %v3408 = vunpack.c.l.b16 %v3276
    %v3409 = vunpack.c.l.b16 %v3277
    %v3410 = vunpack.c.l.b16 %v3278
    %v3411 = vunpack.c.l.b16 %v3279
    %v3412 = vunpack.c.l.b16 %v3280
    %v3413 = vunpack.c.l.b16 %v3281
    %v3414 = vunpack.c.l.b16 %v3282
    %v3415 = vunpack.c.l.b16 %v3283
    %v3416 = vunpack.c.l.b16 %v3284
    %v3417 = vunpack.c.l.b16 %v3285
    %v3418 = vunpack.c.l.b16 %v3286
    %v3419 = vunpack.c.l.b16 %v3287
    %v3420 = vunpack.c.l.b16 %v3288
    %v3421 = vunpack.c.l.b16 %v3289
    %v3422 = vunpack.c.l.b16 %v3290
    %v3423 = vunpack.c.l.b16 %v3291
    %v3424 = vunpack.c.l.b16 %v3292
    %v3425 = vunpack.c.l.b16 %v3293
    %v3426 = vunpack.c.l.b16 %v3294
    %v3427 = vunpack.c.l.b16 %v3295
    %v3428 = vpack.c.b16 %v3365, %v3364
    %v3429 = vpack.c.b16 %v3367, %v3366
    %v3430 = vpack.c.b16 %v3369, %v3368
    %v3431 = vpack.c.b16 %v3371, %v3370
    %v3432 = vpack.c.b16 %v3373, %v3372
    %v3433 = vpack.c.b16 %v3375, %v3374
    %v3434 = vpack.c.b16 %v3377, %v3376
    %v3435 = vpack.c.b16 %v3379, %v3378
    %v3436 = vpack.c.b16 %v3381, %v3380
    %v3437 = vpack.c.b16 %v3383, %v3382
    %v3438 = vpack.c.b16 %v3385, %v3384
    %v3439 = vpack.c.b16 %v3387, %v3386
    %v3440 = vpack.c.b16 %v3389, %v3388
    %v3441 = vpack.c.b16 %v3391, %v3390
    %v3442 = vpack.c.b16 %v3393, %v3392
    %v3443 = vpack.c.b16 %v3395, %v3394
    %v3444 = vpack.c.b16 %v3397, %v3396
    %v3445 = vpack.c.b16 %v3399, %v3398
    %v3446 = vpack.c.b16 %v3401, %v3400
    %v3447 = vpack.c.b16 %v3403, %v3402
    %v3448 = vpack.c.b16 %v3405, %v3404
    %v3449 = vpack.c.b16 %v3407, %v3406
    %v3450 = vpack.c.b16 %v3409, %v3408
    %v3451 = vpack.c.b16 %v3411, %v3410
    %v3452 = vpack.c.b16 %v3413, %v3412
    %v3453 = vpack.c.b16 %v3415, %v3414
    %v3454 = vpack.c.b16 %v3417, %v3416
    %v3455 = vpack.c.b16 %v3419, %v3418
    %v3456 = vpack.c.b16 %v3421, %v3420
    %v3457 = vpack.c.b16 %v3423, %v3422
    %v3458 = vpack.c.b16 %v3425, %v3424
    %v3459 = vpack.c.b16 %v3427, %v3426
    %3492 = vmatpush.bf16.msra.mxu0 %v3435
    %3493 = vmatpush.bf16.msra.mxu0 %v3434
    %3494 = vmatpush.bf16.msra.mxu0 %v3433
    %3495 = vmatpush.bf16.msra.mxu0 %v3432
    %3496 = vmatpush.bf16.msra.mxu0 %v3431
    %3497 = vmatpush.bf16.msra.mxu0 %v3430
    %3498 = vmatpush.bf16.msra.mxu0 %v3429
    %3499 = vmatpush.bf16.msra.mxu0 %v3428
    %3500 = vmatmul.bf16.gmra.mxu0 %v3228
    %v3501 = vpop.f32.mrf.mxu0
    %v3502 = vadd.f32 %v3298, %v3501
    %v3503 = vpop.f32.mrf.mxu0
    %v3504 = vadd.f32 %v3298, %v3503
    %3505 = vdwg.mxu0
    %3506 = vmatpush.bf16.msra.mxu0 %v3443
    %3507 = vmatpush.bf16.msra.mxu0 %v3442
    %3508 = vmatpush.bf16.msra.mxu0 %v3441
    %3509 = vmatpush.bf16.msra.mxu0 %v3440
    %3510 = vmatpush.bf16.msra.mxu0 %v3439
    %3511 = vmatpush.bf16.msra.mxu0 %v3438
    %3512 = vmatpush.bf16.msra.mxu0 %v3437
    %3513 = vmatpush.bf16.msra.mxu0 %v3436
    %3514 = vmatmul.bf16.gmra.mxu0 %v3229
    %v3515 = vpop.f32.mrf.mxu0
    %v3516 = vadd.f32 %v3502, %v3515
    %v3517 = vpop.f32.mrf.mxu0
    %v3518 = vadd.f32 %v3504, %v3517
    %3519 = vdwg.mxu0
    %3520 = vmatpush.bf16.msra.mxu0 %v3451
    %3521 = vmatpush.bf16.msra.mxu0 %v3450
    %3522 = vmatpush.bf16.msra.mxu0 %v3449
    %3523 = vmatpush.bf16.msra.mxu0 %v3448
    %3524 = vmatpush.bf16.msra.mxu0 %v3447
    %3525 = vmatpush.bf16.msra.mxu0 %v3446
    %3526 = vmatpush.bf16.msra.mxu0 %v3445
    %3527 = vmatpush.bf16.msra.mxu0 %v3444
    %3528 = vmatmul.bf16.gmra.mxu0 %v3230
    %v3529 = vpop.f32.mrf.mxu0
    %v3530 = vadd.f32 %v3516, %v3529
    %v3531 = vpop.f32.mrf.mxu0
    %v3532 = vadd.f32 %v3518, %v3531
    %3533 = vdwg.mxu0
    %3534 = vmatpush.bf16.msra.mxu0 %v3459
    %3535 = vmatpush.bf16.msra.mxu0 %v3458
    %3536 = vmatpush.bf16.msra.mxu0 %v3457
    %3537 = vmatpush.bf16.msra.mxu0 %v3456
    %3538 = vmatpush.bf16.msra.mxu0 %v3455
    %3539 = vmatpush.bf16.msra.mxu0 %v3454
    %3540 = vmatpush.bf16.msra.mxu0 %v3453
    %3541 = vmatpush.bf16.msra.mxu0 %v3452
    %3542 = vmatmul.bf16.gmra.mxu0 %v3231
    %v3543 = vpop.f32.mrf.mxu0
    %v3544 = vadd.f32 %v3530, %v3543
    %v3545 = vpop.f32.mrf.mxu0
    %v3546 = vadd.f32 %v3532, %v3545
    %3547 = vdwg.mxu0
    %3548 = vst [vmem:[#allocation13] sm:$0xff] %v3544
    %3549 = vst [vmem:[#allocation13 + $0x8] sm:$0xff] %v3546
    // Predicated region
    $region54: #{tpu_custom_call.1} parent=1 // pred_check
      _
    $region55: #{tpu_custom_call.1} parent=1 // pred_check_branch
      %3551 = sbr.rel (0) target = $region57
    $region56: #{tpu_custom_call.1} parent=1 // pred_region
      %3553 = vsyncadd [#allocation4], 224
      %s3554 = sshll.u32 [#allocation13], 4
      %s3555 = int_to_ptr.vmem [resolvable:$true] %s3554
      %s3556 = sshll.u32 %s7, 4
      %s3557 = int_to_ptr.hbm [resolvable:$true] %s3556
      %3562 = dma.vmem_to_hbm [thread:$0]  %s3555, 32, %s3557, [#allocation4], 32, 32, 2
    $region57: #{tpu_custom_call.1} parent=1 // pred_fallthru
      _
    // Predicated region
    $region58: #{tpu_custom_call.1} parent=1 // pred_check
      _
    $region59: #{tpu_custom_call.1} parent=1 // pred_check_branch
      %3564 = sbr.rel (0) target = $region61
    $region60: #{tpu_custom_call.1} parent=1 // pred_region
      %3566 = dma.done [#allocation4], 256
    $region61: #{tpu_custom_call.1} parent=1 // pred_fallthru
      _
    %3567 = vsyncpa [#allocation3], 1
    %3568 = vsyncpa [#allocation6], 1
    %3569 = vsyncpa [#allocation9], 1
    %3570 = vsyncpa [#allocation12], 1
    %3571 = vsyncpa [#allocation4], 1

</llo_original>
